<compile_context>
chip_gen: v7x
topology: tpu7x:2x2x1
jax: 0.10.0
libtpu: 0.0.40
codegen_flags: <defaults>
</compile_context>

<pallas_src>
import jax
import jax.numpy as jnp
import numpy as np
from jax import lax
from jax.experimental import pallas as pl
from jax.experimental.pallas import tpu as pltpu

LANE = 128      # TPU vreg lane width
SUBLANE = 8     # TPU vreg sublane count (f32)


# ----------------------------- Pallas kernel --------------------------------
def _rnn_mlp_kernel(
    x_ref,            # [T, Bt, D]   time-major input tile
    wih0_ref,         # [D, 4H]      layer-0 input weights (transposed, 0.5-folded)
    whhblk_ref,       # [2H, 8H]     block-diag [[whh0,0],[0,whh1]] (0.5-folded)
    bg0_ref,          # [1, 4H]      layer-0 combined gate bias (0.5-folded)
    wih1_ref,         # [H, 4H]      layer-1 input weights (transposed, 0.5-folded)
    bg1_ref,          # [1, 4H]      layer-1 combined gate bias (0.5-folded)
    w1_ref, b1_ref,   # [H, 128],  [1, 128]   fc1 (lane-padded from 120)
    w2_ref, b2_ref,   # [128, 128],[1, 128]   fc2 (lane-padded from 120x84)
    w3_ref, b3_ref,   # [128, 128],[1, 128]   fc3 (lane-padded from 84x2)
    out_ref,          # [Bt, 128]  (only lanes 0:2 meaningful)
    *scratch,         # optionally: xp0_ref [T, Bt, 4H] (only for large tiles)
):
    T, Bt, D = x_ref.shape
    H = wih1_ref.shape[0]
    G = 4 * H
    use_scratch = len(scratch) == 1

    # ---- hoisted layer-0 input projection: one [T*Bt, D] x [D, 4H] matmul ----
    xp0 = jnp.dot(x_ref[...].reshape(T * Bt, D), wih0_ref[...],
                  preferred_element_type=jnp.float32) + bg0_ref[...]
    if use_scratch:
        xp0_ref = scratch[0]
        xp0_ref[...] = xp0.reshape(T, Bt, G)

    # Hoist weight loads / broadcasts out of the (unrolled) recurrence.
    whh_blk = whhblk_ref[...]                 # [2H, 8H]
    wih1 = wih1_ref[...]                      # [H, 4H]
    bg1 = jnp.broadcast_to(bg1_ref[...], (Bt, G))

    # Lane mask selecting the tanh ("g") gate of the packed [i, f, g, o] layout.
    lane = lax.broadcasted_iota(jnp.int32, (Bt, G), 1)
    g_mask = (lane >= 2 * H) & (lane < 3 * H)

    def lstm_cell(pre, c):
        # i/f/o columns were pre-scaled by 0.5 in the wrapper, so a SINGLE tanh
        # gives both tanh(pre_g) and sigmoid(pre_ifo) = 0.5*tanh(pre_ifo/2)+0.5.
        t_act = jnp.tanh(pre)
        act = jnp.where(g_mask, t_act, 0.5 * t_act + 0.5)
        i_g = act[:, 0 * H:1 * H]
        f_g = act[:, 1 * H:2 * H]
        g_g = act[:, 2 * H:3 * H]
        o_g = act[:, 3 * H:4 * H]
        c_new = f_g * c + i_g * g_g
        h_new = o_g * jnp.tanh(c_new)
        return h_new, c_new

    def step_body(xp0_t, carry):
        h0, c0, h1, c1 = carry
        # One block-diagonal dot produces BOTH layers' recurrent terms
        # (lanes 0:4H -> h0@whh0, lanes 4H:8H -> h1@whh1).
        h01 = jnp.concatenate([h0, h1], axis=1)                 # [Bt, 2H]
        rec = jnp.dot(h01, whh_blk, preferred_element_type=jnp.float32)
        # Layer 0: input projection precomputed; only the recurrent term is serial.
        pre0 = xp0_t + rec[:, :G]
        h0, c0 = lstm_cell(pre0, c0)
        # Layer 1 (fused): consumes h0 of the same timestep.
        pre1 = (jnp.dot(h0, wih1, preferred_element_type=jnp.float32)
                + rec[:, G:] + bg1)
        h1, c1 = lstm_cell(pre1, c1)
        return (h0, c0, h1, c1)

    z = jnp.zeros((Bt, H), jnp.float32)
    carry = (z, z, z, z)
    if not use_scratch:
        # Tiny tile: xp0 lives in vregs; fully static unrolled loop, static
        # sublane-aligned slices (no scratch vst/vld on the serial path).
        for t in range(T):
            carry = step_body(xp0[t * Bt:(t + 1) * Bt, :], carry)
    else:
        unroll = True if T <= 16 else 8   # guard code-size / vreg pressure
        carry = lax.fori_loop(
            0, T, lambda t, c: step_body(scratch[0][t], c), carry, unroll=unroll)
    h1 = carry[2]

    # ---- MLP head on the last timestep of the top layer (lane-dense) ----
    y = jnp.maximum(
        jnp.dot(h1, w1_ref[...], preferred_element_type=jnp.float32) + b1_ref[...], 0.0)
    y = jnp.maximum(
        jnp.dot(y, w2_ref[...], preferred_element_type=jnp.float32) + b2_ref[...], 0.0)
    y = jnp.dot(y, w3_ref[...], preferred_element_type=jnp.float32) + b3_ref[...]
    out_ref[...] = y.astype(out_ref.dtype)


# ------------------------------ wrapper --------------------------------------
def _pad_axis(a, axis, target):
    pad = [(0, 0)] * a.ndim
    pad[axis] = (0, target - a.shape[axis])
    return jnp.pad(a, pad)


def _fold_sigmoid_scale(w, H):
    """Scale i/f/o gate columns by 0.5 (NOT the g/tanh columns) so the kernel
    can compute sigmoid(x) = 0.5*tanh(x/2) + 0.5 from a single tanh."""
    G = 4 * H
    lane = jnp.arange(G)
    scale = jnp.where((lane >= 2 * H) & (lane < 3 * H), 1.0, 0.5).astype(w.dtype)
    return w * scale


@jax.jit
def rnn_model_forward(x_btd, params):
    """x_btd: [B, T, D] float32 (PyTorch batch_first layout). Returns [B, 2]."""
    B, T, D = x_btd.shape
    H = params["whh0"].shape[0]
    G = 4 * H

    # ---- batch tiling: MXU-filling tiles, >=2 tiles when possible (v7x) ----
    if B <= SUBLANE:
        b_tile = SUBLANE
    elif B <= 2 * 128:
        half = (B + 1) // 2
        b_tile = ((half + SUBLANE - 1) // SUBLANE) * SUBLANE
    else:
        b_tile = 128
    b_pad = ((B + b_tile - 1) // b_tile) * b_tile
    n_b = b_pad // b_tile

    # Pad batch to a full tile; transpose to time-major for the kernel.
    x = _pad_axis(x_btd, 0, b_pad)               # [B_pad, T, D]
    x_tbd = jnp.transpose(x, (1, 0, 2))          # [T, B_pad, D]

    # Fold the sigmoid-via-tanh 0.5 pre-scale into the gate weights/biases.
    wih0_s = _fold_sigmoid_scale(params["wih0"], H)
    bg0_s = _fold_sigmoid_scale(params["bg0"], H)
    wih1_s = _fold_sigmoid_scale(params["wih1"], H)
    bg1_s = _fold_sigmoid_scale(params["bg1"], H)
    whh0_s = _fold_sigmoid_scale(params["whh0"], H)
    whh1_s = _fold_sigmoid_scale(params["whh1"], H)

    # Block-diagonal recurrent weight: [h0|h1] @ [[whh0,0],[0,whh1]] -> both
    # layers' recurrent pre-activations in one 256-lane-output MXU push.
    whh_blk = jnp.zeros((2 * H, 2 * G), jnp.float32)
    whh_blk = whh_blk.at[:H, :G].set(whh0_s)
    whh_blk = whh_blk.at[H:, G:].set(whh1_s)

    # Lane-pad the MLP head with zeros (identical math, 128-lane-dense tiles).
    w1 = _pad_axis(params["w1"], 1, LANE)                         # [H, 128]
    b1 = _pad_axis(params["b1"], 1, LANE)                         # [1, 128]
    w2 = _pad_axis(_pad_axis(params["w2"], 0, LANE), 1, LANE)     # [128, 128]
    b2 = _pad_axis(params["b2"], 1, LANE)                         # [1, 128]
    w3 = _pad_axis(_pad_axis(params["w3"], 0, LANE), 1, LANE)     # [128, 128]
    b3 = _pad_axis(params["b3"], 1, LANE)                         # [1, 128]

    # Keep the hoisted projection in vregs for tiny tiles; VMEM scratch otherwise.
    use_scratch = (T * b_tile) > 64
    scratch_shapes = ([pltpu.VMEM((T, b_tile, G), jnp.float32)]
                      if use_scratch else [])

    # ---- per-tile VMEM budget (raise the scoped limit only when needed) ----
    weight_bytes = 4 * (D * G + 2 * H * 2 * G + H * LANE + 2 * LANE * LANE
                        + 2 * G + 3 * LANE)
    vmem_need = (2 * T * b_tile * D * 4                      # x tile, dbl-buffered
                 + (T * b_tile * G * 4 if use_scratch else 0)
                 + 2 * b_tile * LANE * 4                     # out tile, dbl-buffered
                 + weight_bytes)
    cp_kwargs = dict(dimension_semantics=("parallel",))
    if vmem_need > (24 << 20):
        cp_kwargs["vmem_limit_bytes"] = min(int(vmem_need * 3 // 2), 96 << 20)

    vmem = pl.BlockSpec(memory_space=pltpu.MemorySpace.VMEM)
    out = pl.pallas_call(
        _rnn_mlp_kernel,
        out_shape=jax.ShapeDtypeStruct((b_pad, LANE), jnp.float32),
        grid=(n_b,),
        in_specs=[
            pl.BlockSpec((T, b_tile, D), lambda b: (0, b, 0)),    # x, batch-tiled
            vmem, vmem, vmem,                                     # wih0, whh_blk, bg0
            vmem, vmem,                                           # wih1, bg1
            vmem, vmem,                                           # w1, b1
            vmem, vmem,                                           # w2, b2
            vmem, vmem,                                           # w3, b3
        ],
        out_specs=pl.BlockSpec((b_tile, LANE), lambda b: (b, 0)),
        scratch_shapes=scratch_shapes,
        compiler_params=pltpu.CompilerParams(**cp_kwargs),
    )(x_tbd,
      wih0_s, whh_blk, bg0_s,
      wih1_s, bg1_s,
      w1, b1, w2, b2, w3, b3)

    return out[:B, :2]


# ---------------------------- reference (pure JAX) ---------------------------
def _ref_forward(x_btd, params):
    B, T, D = x_btd.shape
    H = params["whh0"].shape[0]

    def layer(seq, wih, whh, bg):  # seq: [B, T, in]
        def step(carry, x_t):
            h, c = carry
            gates = x_t @ wih + h @ whh + bg
            i = jax.nn.sigmoid(gates[:, 0 * H:1 * H])
            f = jax.nn.sigmoid(gates[:, 1 * H:2 * H])
            g = jnp.tanh(gates[:, 2 * H:3 * H])
            o = jax.nn.sigmoid(gates[:, 3 * H:4 * H])
            c = f * c + i * g
            h = o * jnp.tanh(c)
            return (h, c), h
        init = (jnp.zeros((B, H), jnp.float32), jnp.zeros((B, H), jnp.float32))
        _, hs = lax.scan(step, init, jnp.transpose(seq, (1, 0, 2)))
        return jnp.transpose(hs, (1, 0, 2))  # [B, T, H]

    h = layer(x_btd, params["wih0"], params["whh0"], params["bg0"])
    h = layer(h, params["wih1"], params["whh1"], params["bg1"])
    h = h[:, -1, :]
    h = jnp.maximum(h @ params["w1"] + params["b1"], 0.0)
    h = jnp.maximum(h @ params["w2"] + params["b2"], 0.0)
    return h @ params["w3"] + params["b3"]


# ------------------------------ param init -----------------------------------
def init_params(key, input_size, hidden_size):
    H = hidden_size
    k = 1.0 / np.sqrt(H)
    ks = jax.random.split(key, 16)

    def u(key, shape, bound):
        return jax.random.uniform(key, shape, jnp.float32, -bound, bound)

    params = {
        # LSTM weights stored pre-transposed: [in_dim, 4H]; gate biases combined.
        "wih0": u(ks[0], (input_size, 4 * H), k),
        "whh0": u(ks[1], (H, 4 * H), k),
        "bg0": u(ks[2], (1, 4 * H), k) + u(ks[3], (1, 4 * H), k),
        "wih1": u(ks[4], (H, 4 * H), k),
        "whh1": u(ks[5], (H, 4 * H), k),
        "bg1": u(ks[6], (1, 4 * H), k) + u(ks[7], (1, 4 * H), k),
        # Linear layers, weights pre-transposed to [in, out] (PyTorch shapes).
        "w1": u(ks[8], (H, 120), 1.0 / np.sqrt(H)),
        "b1": u(ks[9], (1, 120), 1.0 / np.sqrt(H)),
        "w2": u(ks[10], (120, 84), 1.0 / np.sqrt(120)),
        "b2": u(ks[11], (1, 84), 1.0 / np.sqrt(120)),
        "w3": u(ks[12], (84, 2), 1.0 / np.sqrt(84)),
        "b3": u(ks[13], (1, 2), 1.0 / np.sqrt(84)),
    }
    return params

# TODO(synk): only rnn_type='LSTM' is implemented; 'GRU', 'BILSTM', 'RNN_RELU'
# branches (and the init-time-only LSTM2 LSTMCell warm-up, which does not affect
# forward()) are not translated.


if __name__ == "__main__":
    B, T, INPUT_SIZE, HIDDEN_SIZE = 2, 8, 16, 32  # n_layers = 2

    key = jax.random.PRNGKey(0)
    kx, kp = jax.random.split(key)
    x = jax.random.normal(kx, (B, T, INPUT_SIZE), jnp.float32)
    params = init_params(kp, INPUT_SIZE, HIDDEN_SIZE)

    out = rnn_model_forward(x, params)
    out = jax.block_until_ready(out)

    ref = jax.block_until_ready(_ref_forward(x, params))
    np.testing.assert_allclose(np.asarray(out), np.asarray(ref), rtol=1e-4, atol=1e-4)
    assert out.shape == (B, 2)

    print("KERNEL_OK")
</pallas_src>

<mosaic_0001>
module attributes {stable_mosaic.version = 11 : i64} {
  func.func @_rnn_mlp_kernel(%arg0: i32, %arg1: memref<8x8x16xf32, #tpu.memory_space<vmem>>, %arg2: memref<16x128xf32, #tpu.memory_space<vmem>>, %arg3: memref<64x256xf32, #tpu.memory_space<vmem>>, %arg4: memref<1x128xf32, #tpu.memory_space<vmem>>, %arg5: memref<32x128xf32, #tpu.memory_space<vmem>>, %arg6: memref<1x128xf32, #tpu.memory_space<vmem>>, %arg7: memref<32x128xf32, #tpu.memory_space<vmem>>, %arg8: memref<1x128xf32, #tpu.memory_space<vmem>>, %arg9: memref<128x128xf32, #tpu.memory_space<vmem>>, %arg10: memref<1x128xf32, #tpu.memory_space<vmem>>, %arg11: memref<128x128xf32, #tpu.memory_space<vmem>>, %arg12: memref<1x128xf32, #tpu.memory_space<vmem>>, %arg13: memref<8x128xf32, #tpu.memory_space<vmem>>) attributes {dimension_semantics = [#tpu.dimension_semantics<parallel>], iteration_bounds = array<i64: 1>, scalar_prefetch = 0 : i64, scratch_operands = 0 : i64, tpu.core_type = #tpu.core_type<tc>, window_params = [{transform_indices = @transform_0, window_bounds = array<i64: 8, 8, 16>}, {pipeline_mode = #tpu.pipeline_mode<synchronous>, transform_indices = @transform_1, window_bounds = array<i64: 16, 128>}, {pipeline_mode = #tpu.pipeline_mode<synchronous>, transform_indices = @transform_2, window_bounds = array<i64: 64, 256>}, {pipeline_mode = #tpu.pipeline_mode<synchronous>, transform_indices = @transform_3, window_bounds = array<i64: 1, 128>}, {pipeline_mode = #tpu.pipeline_mode<synchronous>, transform_indices = @transform_4, window_bounds = array<i64: 32, 128>}, {pipeline_mode = #tpu.pipeline_mode<synchronous>, transform_indices = @transform_5, window_bounds = array<i64: 1, 128>}, {pipeline_mode = #tpu.pipeline_mode<synchronous>, transform_indices = @transform_6, window_bounds = array<i64: 32, 128>}, {pipeline_mode = #tpu.pipeline_mode<synchronous>, transform_indices = @transform_7, window_bounds = array<i64: 1, 128>}, {pipeline_mode = #tpu.pipeline_mode<synchronous>, transform_indices = @transform_8, window_bounds = array<i64: 128, 128>}, {pipeline_mode = #tpu.pipeline_mode<synchronous>, transform_indices = @transform_9, window_bounds = array<i64: 1, 128>}, {pipeline_mode = #tpu.pipeline_mode<synchronous>, transform_indices = @transform_10, window_bounds = array<i64: 128, 128>}, {pipeline_mode = #tpu.pipeline_mode<synchronous>, transform_indices = @transform_11, window_bounds = array<i64: 1, 128>}, {transform_indices = @transform_12, window_bounds = array<i64: 8, 128>}]} {
    %c0 = arith.constant 0 : index
    %c0_0 = arith.constant 0 : index
    %c0_1 = arith.constant 0 : index
    %0 = vector.load %arg1[%c0, %c0_0, %c0_1] : memref<8x8x16xf32, #tpu.memory_space<vmem>>, vector<8x8x16xf32>
    %1 = vector.shape_cast %0 : vector<8x8x16xf32> to vector<64x16xf32>
    %c0_2 = arith.constant 0 : index
    %c0_3 = arith.constant 0 : index
    %2 = vector.load %arg2[%c0_2, %c0_3] : memref<16x128xf32, #tpu.memory_space<vmem>>, vector<16x128xf32>
    %cst = arith.constant dense<0.000000e+00> : vector<64x128xf32>
    %3 = tpu.matmul %1, %2, %cst {dimension_numbers = #tpu.dot_dimension_numbers<[1], [0], [0], [1], [0, 0, 1, 1], [], []>} : vector<64x16xf32>, vector<16x128xf32>, vector<64x128xf32> -> vector<64x128xf32>
    %c0_4 = arith.constant 0 : index
    %c0_5 = arith.constant 0 : index
    %4 = vector.load %arg4[%c0_4, %c0_5] : memref<1x128xf32, #tpu.memory_space<vmem>>, vector<1x128xf32>
    %5 = vector.broadcast %4 : vector<1x128xf32> to vector<64x128xf32>
    %6 = arith.addf %3, %5 : vector<64x128xf32>
    %c0_6 = arith.constant 0 : index
    %c0_7 = arith.constant 0 : index
    %7 = vector.load %arg3[%c0_6, %c0_7] : memref<64x256xf32, #tpu.memory_space<vmem>>, vector<64x256xf32>
    %c0_8 = arith.constant 0 : index
    %c0_9 = arith.constant 0 : index
    %8 = vector.load %arg5[%c0_8, %c0_9] : memref<32x128xf32, #tpu.memory_space<vmem>>, vector<32x128xf32>
    %c0_10 = arith.constant 0 : index
    %c0_11 = arith.constant 0 : index
    %9 = vector.load %arg6[%c0_10, %c0_11] : memref<1x128xf32, #tpu.memory_space<vmem>>, vector<1x128xf32>
    %10 = vector.shape_cast %9 : vector<1x128xf32> to vector<1x128xf32>
    %11 = vector.broadcast %10 : vector<1x128xf32> to vector<8x128xf32>
    %12 = tpu.iota {dimensions = array<i32: 1>} : vector<8x128xi32>
    %c64_i32 = arith.constant 64 : i32
    %13 = vector.broadcast %c64_i32 : i32 to vector<8x128xi32>
    %14 = arith.cmpi sge, %12, %13 : vector<8x128xi32>
    %c96_i32 = arith.constant 96 : i32
    %15 = vector.broadcast %c96_i32 : i32 to vector<8x128xi32>
    %16 = arith.cmpi slt, %12, %15 : vector<8x128xi32>
    %17 = arith.andi %14, %16 : vector<8x128xi1>
    %cst_12 = arith.constant 0.000000e+00 : f32
    %18 = vector.broadcast %cst_12 : f32 to vector<8x32xf32>
    %19 = vector.extract_strided_slice %6 {offsets = [0, 0], sizes = [8, 128], strides = [1, 1]} : vector<64x128xf32> to vector<8x128xf32>
    %20 = tpu.concatenate %18, %18 in 1 : vector<8x32xf32>, vector<8x32xf32> -> vector<8x64xf32>
    %cst_13 = arith.constant dense<0.000000e+00> : vector<8x256xf32>
    %21 = tpu.matmul %20, %7, %cst_13 {dimension_numbers = #tpu.dot_dimension_numbers<[1], [0], [0], [1], [0, 0, 1, 1], [], []>} : vector<8x64xf32>, vector<64x256xf32>, vector<8x256xf32> -> vector<8x256xf32>
    %22 = vector.extract_strided_slice %21 {offsets = [0, 0], sizes = [8, 128], strides = [1, 1]} : vector<8x256xf32> to vector<8x128xf32>
    %23 = arith.addf %19, %22 : vector<8x128xf32>
    %24 = math.tanh %23 : vector<8x128xf32>
    %cst_14 = arith.constant 5.000000e-01 : f32
    %25 = vector.broadcast %cst_14 : f32 to vector<8x128xf32>
    %26 = arith.mulf %25, %24 : vector<8x128xf32>
    %cst_15 = arith.constant 5.000000e-01 : f32
    %27 = vector.broadcast %cst_15 : f32 to vector<8x128xf32>
    %28 = arith.addf %26, %27 : vector<8x128xf32>
    %29 = arith.select %17, %24, %28 : vector<8x128xi1>, vector<8x128xf32>
    %30 = vector.extract_strided_slice %29 {offsets = [0, 0], sizes = [8, 32], strides = [1, 1]} : vector<8x128xf32> to vector<8x32xf32>
    %31 = vector.extract_strided_slice %29 {offsets = [0, 32], sizes = [8, 32], strides = [1, 1]} : vector<8x128xf32> to vector<8x32xf32>
    %32 = vector.extract_strided_slice %29 {offsets = [0, 64], sizes = [8, 32], strides = [1, 1]} : vector<8x128xf32> to vector<8x32xf32>
    %33 = vector.extract_strided_slice %29 {offsets = [0, 96], sizes = [8, 32], strides = [1, 1]} : vector<8x128xf32> to vector<8x32xf32>
    %34 = arith.mulf %31, %18 : vector<8x32xf32>
    %35 = arith.mulf %30, %32 : vector<8x32xf32>
    %36 = arith.addf %34, %35 : vector<8x32xf32>
    %37 = math.tanh %36 : vector<8x32xf32>
    %38 = arith.mulf %33, %37 : vector<8x32xf32>
    %cst_16 = arith.constant dense<0.000000e+00> : vector<8x128xf32>
    %39 = tpu.matmul %38, %8, %cst_16 {dimension_numbers = #tpu.dot_dimension_numbers<[1], [0], [0], [1], [0, 0, 1, 1], [], []>} : vector<8x32xf32>, vector<32x128xf32>, vector<8x128xf32> -> vector<8x128xf32>
    %40 = vector.extract_strided_slice %21 {offsets = [0, 128], sizes = [8, 128], strides = [1, 1]} : vector<8x256xf32> to vector<8x128xf32>
    %41 = arith.addf %39, %40 : vector<8x128xf32>
    %42 = arith.addf %41, %11 : vector<8x128xf32>
    %43 = math.tanh %42 : vector<8x128xf32>
    %cst_17 = arith.constant 5.000000e-01 : f32
    %44 = vector.broadcast %cst_17 : f32 to vector<8x128xf32>
    %45 = arith.mulf %44, %43 : vector<8x128xf32>
    %cst_18 = arith.constant 5.000000e-01 : f32
    %46 = vector.broadcast %cst_18 : f32 to vector<8x128xf32>
    %47 = arith.addf %45, %46 : vector<8x128xf32>
    %48 = arith.select %17, %43, %47 : vector<8x128xi1>, vector<8x128xf32>
    %49 = vector.extract_strided_slice %48 {offsets = [0, 0], sizes = [8, 32], strides = [1, 1]} : vector<8x128xf32> to vector<8x32xf32>
    %50 = vector.extract_strided_slice %48 {offsets = [0, 32], sizes = [8, 32], strides = [1, 1]} : vector<8x128xf32> to vector<8x32xf32>
    %51 = vector.extract_strided_slice %48 {offsets = [0, 64], sizes = [8, 32], strides = [1, 1]} : vector<8x128xf32> to vector<8x32xf32>
    %52 = vector.extract_strided_slice %48 {offsets = [0, 96], sizes = [8, 32], strides = [1, 1]} : vector<8x128xf32> to vector<8x32xf32>
    %53 = arith.mulf %50, %18 : vector<8x32xf32>
    %54 = arith.mulf %49, %51 : vector<8x32xf32>
    %55 = arith.addf %53, %54 : vector<8x32xf32>
    %56 = math.tanh %55 : vector<8x32xf32>
    %57 = arith.mulf %52, %56 : vector<8x32xf32>
    %58 = vector.extract_strided_slice %6 {offsets = [8, 0], sizes = [8, 128], strides = [1, 1]} : vector<64x128xf32> to vector<8x128xf32>
    %59 = tpu.concatenate %38, %57 in 1 : vector<8x32xf32>, vector<8x32xf32> -> vector<8x64xf32>
    %cst_19 = arith.constant dense<0.000000e+00> : vector<8x256xf32>
    %60 = tpu.matmul %59, %7, %cst_19 {dimension_numbers = #tpu.dot_dimension_numbers<[1], [0], [0], [1], [0, 0, 1, 1], [], []>} : vector<8x64xf32>, vector<64x256xf32>, vector<8x256xf32> -> vector<8x256xf32>
    %61 = vector.extract_strided_slice %60 {offsets = [0, 0], sizes = [8, 128], strides = [1, 1]} : vector<8x256xf32> to vector<8x128xf32>
    %62 = arith.addf %58, %61 : vector<8x128xf32>
    %63 = math.tanh %62 : vector<8x128xf32>
    %cst_20 = arith.constant 5.000000e-01 : f32
    %64 = vector.broadcast %cst_20 : f32 to vector<8x128xf32>
    %65 = arith.mulf %64, %63 : vector<8x128xf32>
    %cst_21 = arith.constant 5.000000e-01 : f32
    %66 = vector.broadcast %cst_21 : f32 to vector<8x128xf32>
    %67 = arith.addf %65, %66 : vector<8x128xf32>
    %68 = arith.select %17, %63, %67 : vector<8x128xi1>, vector<8x128xf32>
    %69 = vector.extract_strided_slice %68 {offsets = [0, 0], sizes = [8, 32], strides = [1, 1]} : vector<8x128xf32> to vector<8x32xf32>
    %70 = vector.extract_strided_slice %68 {offsets = [0, 32], sizes = [8, 32], strides = [1, 1]} : vector<8x128xf32> to vector<8x32xf32>
    %71 = vector.extract_strided_slice %68 {offsets = [0, 64], sizes = [8, 32], strides = [1, 1]} : vector<8x128xf32> to vector<8x32xf32>
    %72 = vector.extract_strided_slice %68 {offsets = [0, 96], sizes = [8, 32], strides = [1, 1]} : vector<8x128xf32> to vector<8x32xf32>
    %73 = arith.mulf %70, %36 : vector<8x32xf32>
    %74 = arith.mulf %69, %71 : vector<8x32xf32>
    %75 = arith.addf %73, %74 : vector<8x32xf32>
    %76 = math.tanh %75 : vector<8x32xf32>
    %77 = arith.mulf %72, %76 : vector<8x32xf32>
    %cst_22 = arith.constant dense<0.000000e+00> : vector<8x128xf32>
    %78 = tpu.matmul %77, %8, %cst_22 {dimension_numbers = #tpu.dot_dimension_numbers<[1], [0], [0], [1], [0, 0, 1, 1], [], []>} : vector<8x32xf32>, vector<32x128xf32>, vector<8x128xf32> -> vector<8x128xf32>
    %79 = vector.extract_strided_slice %60 {offsets = [0, 128], sizes = [8, 128], strides = [1, 1]} : vector<8x256xf32> to vector<8x128xf32>
    %80 = arith.addf %78, %79 : vector<8x128xf32>
    %81 = arith.addf %80, %11 : vector<8x128xf32>
    %82 = math.tanh %81 : vector<8x128xf32>
    %cst_23 = arith.constant 5.000000e-01 : f32
    %83 = vector.broadcast %cst_23 : f32 to vector<8x128xf32>
    %84 = arith.mulf %83, %82 : vector<8x128xf32>
    %cst_24 = arith.constant 5.000000e-01 : f32
    %85 = vector.broadcast %cst_24 : f32 to vector<8x128xf32>
    %86 = arith.addf %84, %85 : vector<8x128xf32>
    %87 = arith.select %17, %82, %86 : vector<8x128xi1>, vector<8x128xf32>
    %88 = vector.extract_strided_slice %87 {offsets = [0, 0], sizes = [8, 32], strides = [1, 1]} : vector<8x128xf32> to vector<8x32xf32>
    %89 = vector.extract_strided_slice %87 {offsets = [0, 32], sizes = [8, 32], strides = [1, 1]} : vector<8x128xf32> to vector<8x32xf32>
    %90 = vector.extract_strided_slice %87 {offsets = [0, 64], sizes = [8, 32], strides = [1, 1]} : vector<8x128xf32> to vector<8x32xf32>
    %91 = vector.extract_strided_slice %87 {offsets = [0, 96], sizes = [8, 32], strides = [1, 1]} : vector<8x128xf32> to vector<8x32xf32>
    %92 = arith.mulf %89, %55 : vector<8x32xf32>
    %93 = arith.mulf %88, %90 : vector<8x32xf32>
    %94 = arith.addf %92, %93 : vector<8x32xf32>
    %95 = math.tanh %94 : vector<8x32xf32>
    %96 = arith.mulf %91, %95 : vector<8x32xf32>
    %97 = vector.extract_strided_slice %6 {offsets = [16, 0], sizes = [8, 128], strides = [1, 1]} : vector<64x128xf32> to vector<8x128xf32>
    %98 = tpu.concatenate %77, %96 in 1 : vector<8x32xf32>, vector<8x32xf32> -> vector<8x64xf32>
    %cst_25 = arith.constant dense<0.000000e+00> : vector<8x256xf32>
    %99 = tpu.matmul %98, %7, %cst_25 {dimension_numbers = #tpu.dot_dimension_numbers<[1], [0], [0], [1], [0, 0, 1, 1], [], []>} : vector<8x64xf32>, vector<64x256xf32>, vector<8x256xf32> -> vector<8x256xf32>
    %100 = vector.extract_strided_slice %99 {offsets = [0, 0], sizes = [8, 128], strides = [1, 1]} : vector<8x256xf32> to vector<8x128xf32>
    %101 = arith.addf %97, %100 : vector<8x128xf32>
    %102 = math.tanh %101 : vector<8x128xf32>
    %cst_26 = arith.constant 5.000000e-01 : f32
    %103 = vector.broadcast %cst_26 : f32 to vector<8x128xf32>
    %104 = arith.mulf %103, %102 : vector<8x128xf32>
    %cst_27 = arith.constant 5.000000e-01 : f32
    %105 = vector.broadcast %cst_27 : f32 to vector<8x128xf32>
    %106 = arith.addf %104, %105 : vector<8x128xf32>
    %107 = arith.select %17, %102, %106 : vector<8x128xi1>, vector<8x128xf32>
    %108 = vector.extract_strided_slice %107 {offsets = [0, 0], sizes = [8, 32], strides = [1, 1]} : vector<8x128xf32> to vector<8x32xf32>
    %109 = vector.extract_strided_slice %107 {offsets = [0, 32], sizes = [8, 32], strides = [1, 1]} : vector<8x128xf32> to vector<8x32xf32>
    %110 = vector.extract_strided_slice %107 {offsets = [0, 64], sizes = [8, 32], strides = [1, 1]} : vector<8x128xf32> to vector<8x32xf32>
    %111 = vector.extract_strided_slice %107 {offsets = [0, 96], sizes = [8, 32], strides = [1, 1]} : vector<8x128xf32> to vector<8x32xf32>
    %112 = arith.mulf %109, %75 : vector<8x32xf32>
    %113 = arith.mulf %108, %110 : vector<8x32xf32>
    %114 = arith.addf %112, %113 : vector<8x32xf32>
    %115 = math.tanh %114 : vector<8x32xf32>
    %116 = arith.mulf %111, %115 : vector<8x32xf32>
    %cst_28 = arith.constant dense<0.000000e+00> : vector<8x128xf32>
    %117 = tpu.matmul %116, %8, %cst_28 {dimension_numbers = #tpu.dot_dimension_numbers<[1], [0], [0], [1], [0, 0, 1, 1], [], []>} : vector<8x32xf32>, vector<32x128xf32>, vector<8x128xf32> -> vector<8x128xf32>
    %118 = vector.extract_strided_slice %99 {offsets = [0, 128], sizes = [8, 128], strides = [1, 1]} : vector<8x256xf32> to vector<8x128xf32>
    %119 = arith.addf %117, %118 : vector<8x128xf32>
    %120 = arith.addf %119, %11 : vector<8x128xf32>
    %121 = math.tanh %120 : vector<8x128xf32>
    %cst_29 = arith.constant 5.000000e-01 : f32
    %122 = vector.broadcast %cst_29 : f32 to vector<8x128xf32>
    %123 = arith.mulf %122, %121 : vector<8x128xf32>
    %cst_30 = arith.constant 5.000000e-01 : f32
    %124 = vector.broadcast %cst_30 : f32 to vector<8x128xf32>
    %125 = arith.addf %123, %124 : vector<8x128xf32>
    %126 = arith.select %17, %121, %125 : vector<8x128xi1>, vector<8x128xf32>
    %127 = vector.extract_strided_slice %126 {offsets = [0, 0], sizes = [8, 32], strides = [1, 1]} : vector<8x128xf32> to vector<8x32xf32>
    %128 = vector.extract_strided_slice %126 {offsets = [0, 32], sizes = [8, 32], strides = [1, 1]} : vector<8x128xf32> to vector<8x32xf32>
    %129 = vector.extract_strided_slice %126 {offsets = [0, 64], sizes = [8, 32], strides = [1, 1]} : vector<8x128xf32> to vector<8x32xf32>
    %130 = vector.extract_strided_slice %126 {offsets = [0, 96], sizes = [8, 32], strides = [1, 1]} : vector<8x128xf32> to vector<8x32xf32>
    %131 = arith.mulf %128, %94 : vector<8x32xf32>
    %132 = arith.mulf %127, %129 : vector<8x32xf32>
    %133 = arith.addf %131, %132 : vector<8x32xf32>
    %134 = math.tanh %133 : vector<8x32xf32>
    %135 = arith.mulf %130, %134 : vector<8x32xf32>
    %136 = vector.extract_strided_slice %6 {offsets = [24, 0], sizes = [8, 128], strides = [1, 1]} : vector<64x128xf32> to vector<8x128xf32>
    %137 = tpu.concatenate %116, %135 in 1 : vector<8x32xf32>, vector<8x32xf32> -> vector<8x64xf32>
    %cst_31 = arith.constant dense<0.000000e+00> : vector<8x256xf32>
    %138 = tpu.matmul %137, %7, %cst_31 {dimension_numbers = #tpu.dot_dimension_numbers<[1], [0], [0], [1], [0, 0, 1, 1], [], []>} : vector<8x64xf32>, vector<64x256xf32>, vector<8x256xf32> -> vector<8x256xf32>
    %139 = vector.extract_strided_slice %138 {offsets = [0, 0], sizes = [8, 128], strides = [1, 1]} : vector<8x256xf32> to vector<8x128xf32>
    %140 = arith.addf %136, %139 : vector<8x128xf32>
    %141 = math.tanh %140 : vector<8x128xf32>
    %cst_32 = arith.constant 5.000000e-01 : f32
    %142 = vector.broadcast %cst_32 : f32 to vector<8x128xf32>
    %143 = arith.mulf %142, %141 : vector<8x128xf32>
    %cst_33 = arith.constant 5.000000e-01 : f32
    %144 = vector.broadcast %cst_33 : f32 to vector<8x128xf32>
    %145 = arith.addf %143, %144 : vector<8x128xf32>
    %146 = arith.select %17, %141, %145 : vector<8x128xi1>, vector<8x128xf32>
    %147 = vector.extract_strided_slice %146 {offsets = [0, 0], sizes = [8, 32], strides = [1, 1]} : vector<8x128xf32> to vector<8x32xf32>
    %148 = vector.extract_strided_slice %146 {offsets = [0, 32], sizes = [8, 32], strides = [1, 1]} : vector<8x128xf32> to vector<8x32xf32>
    %149 = vector.extract_strided_slice %146 {offsets = [0, 64], sizes = [8, 32], strides = [1, 1]} : vector<8x128xf32> to vector<8x32xf32>
    %150 = vector.extract_strided_slice %146 {offsets = [0, 96], sizes = [8, 32], strides = [1, 1]} : vector<8x128xf32> to vector<8x32xf32>
    %151 = arith.mulf %148, %114 : vector<8x32xf32>
    %152 = arith.mulf %147, %149 : vector<8x32xf32>
    %153 = arith.addf %151, %152 : vector<8x32xf32>
    %154 = math.tanh %153 : vector<8x32xf32>
    %155 = arith.mulf %150, %154 : vector<8x32xf32>
    %cst_34 = arith.constant dense<0.000000e+00> : vector<8x128xf32>
    %156 = tpu.matmul %155, %8, %cst_34 {dimension_numbers = #tpu.dot_dimension_numbers<[1], [0], [0], [1], [0, 0, 1, 1], [], []>} : vector<8x32xf32>, vector<32x128xf32>, vector<8x128xf32> -> vector<8x128xf32>
    %157 = vector.extract_strided_slice %138 {offsets = [0, 128], sizes = [8, 128], strides = [1, 1]} : vector<8x256xf32> to vector<8x128xf32>
    %158 = arith.addf %156, %157 : vector<8x128xf32>
    %159 = arith.addf %158, %11 : vector<8x128xf32>
    %160 = math.tanh %159 : vector<8x128xf32>
    %cst_35 = arith.constant 5.000000e-01 : f32
    %161 = vector.broadcast %cst_35 : f32 to vector<8x128xf32>
    %162 = arith.mulf %161, %160 : vector<8x128xf32>
    %cst_36 = arith.constant 5.000000e-01 : f32
    %163 = vector.broadcast %cst_36 : f32 to vector<8x128xf32>
    %164 = arith.addf %162, %163 : vector<8x128xf32>
    %165 = arith.select %17, %160, %164 : vector<8x128xi1>, vector<8x128xf32>
    %166 = vector.extract_strided_slice %165 {offsets = [0, 0], sizes = [8, 32], strides = [1, 1]} : vector<8x128xf32> to vector<8x32xf32>
    %167 = vector.extract_strided_slice %165 {offsets = [0, 32], sizes = [8, 32], strides = [1, 1]} : vector<8x128xf32> to vector<8x32xf32>
    %168 = vector.extract_strided_slice %165 {offsets = [0, 64], sizes = [8, 32], strides = [1, 1]} : vector<8x128xf32> to vector<8x32xf32>
    %169 = vector.extract_strided_slice %165 {offsets = [0, 96], sizes = [8, 32], strides = [1, 1]} : vector<8x128xf32> to vector<8x32xf32>
    %170 = arith.mulf %167, %133 : vector<8x32xf32>
    %171 = arith.mulf %166, %168 : vector<8x32xf32>
    %172 = arith.addf %170, %171 : vector<8x32xf32>
    %173 = math.tanh %172 : vector<8x32xf32>
    %174 = arith.mulf %169, %173 : vector<8x32xf32>
    %175 = vector.extract_strided_slice %6 {offsets = [32, 0], sizes = [8, 128], strides = [1, 1]} : vector<64x128xf32> to vector<8x128xf32>
    %176 = tpu.concatenate %155, %174 in 1 : vector<8x32xf32>, vector<8x32xf32> -> vector<8x64xf32>
    %cst_37 = arith.constant dense<0.000000e+00> : vector<8x256xf32>
    %177 = tpu.matmul %176, %7, %cst_37 {dimension_numbers = #tpu.dot_dimension_numbers<[1], [0], [0], [1], [0, 0, 1, 1], [], []>} : vector<8x64xf32>, vector<64x256xf32>, vector<8x256xf32> -> vector<8x256xf32>
    %178 = vector.extract_strided_slice %177 {offsets = [0, 0], sizes = [8, 128], strides = [1, 1]} : vector<8x256xf32> to vector<8x128xf32>
    %179 = arith.addf %175, %178 : vector<8x128xf32>
    %180 = math.tanh %179 : vector<8x128xf32>
    %cst_38 = arith.constant 5.000000e-01 : f32
    %181 = vector.broadcast %cst_38 : f32 to vector<8x128xf32>
    %182 = arith.mulf %181, %180 : vector<8x128xf32>
    %cst_39 = arith.constant 5.000000e-01 : f32
    %183 = vector.broadcast %cst_39 : f32 to vector<8x128xf32>
    %184 = arith.addf %182, %183 : vector<8x128xf32>
    %185 = arith.select %17, %180, %184 : vector<8x128xi1>, vector<8x128xf32>
    %186 = vector.extract_strided_slice %185 {offsets = [0, 0], sizes = [8, 32], strides = [1, 1]} : vector<8x128xf32> to vector<8x32xf32>
    %187 = vector.extract_strided_slice %185 {offsets = [0, 32], sizes = [8, 32], strides = [1, 1]} : vector<8x128xf32> to vector<8x32xf32>
    %188 = vector.extract_strided_slice %185 {offsets = [0, 64], sizes = [8, 32], strides = [1, 1]} : vector<8x128xf32> to vector<8x32xf32>
    %189 = vector.extract_strided_slice %185 {offsets = [0, 96], sizes = [8, 32], strides = [1, 1]} : vector<8x128xf32> to vector<8x32xf32>
    %190 = arith.mulf %187, %153 : vector<8x32xf32>
    %191 = arith.mulf %186, %188 : vector<8x32xf32>
    %192 = arith.addf %190, %191 : vector<8x32xf32>
    %193 = math.tanh %192 : vector<8x32xf32>
    %194 = arith.mulf %189, %193 : vector<8x32xf32>
    %cst_40 = arith.constant dense<0.000000e+00> : vector<8x128xf32>
    %195 = tpu.matmul %194, %8, %cst_40 {dimension_numbers = #tpu.dot_dimension_numbers<[1], [0], [0], [1], [0, 0, 1, 1], [], []>} : vector<8x32xf32>, vector<32x128xf32>, vector<8x128xf32> -> vector<8x128xf32>
    %196 = vector.extract_strided_slice %177 {offsets = [0, 128], sizes = [8, 128], strides = [1, 1]} : vector<8x256xf32> to vector<8x128xf32>
    %197 = arith.addf %195, %196 : vector<8x128xf32>
    %198 = arith.addf %197, %11 : vector<8x128xf32>
    %199 = math.tanh %198 : vector<8x128xf32>
    %cst_41 = arith.constant 5.000000e-01 : f32
    %200 = vector.broadcast %cst_41 : f32 to vector<8x128xf32>
    %201 = arith.mulf %200, %199 : vector<8x128xf32>
    %cst_42 = arith.constant 5.000000e-01 : f32
    %202 = vector.broadcast %cst_42 : f32 to vector<8x128xf32>
    %203 = arith.addf %201, %202 : vector<8x128xf32>
    %204 = arith.select %17, %199, %203 : vector<8x128xi1>, vector<8x128xf32>
    %205 = vector.extract_strided_slice %204 {offsets = [0, 0], sizes = [8, 32], strides = [1, 1]} : vector<8x128xf32> to vector<8x32xf32>
    %206 = vector.extract_strided_slice %204 {offsets = [0, 32], sizes = [8, 32], strides = [1, 1]} : vector<8x128xf32> to vector<8x32xf32>
    %207 = vector.extract_strided_slice %204 {offsets = [0, 64], sizes = [8, 32], strides = [1, 1]} : vector<8x128xf32> to vector<8x32xf32>
    %208 = vector.extract_strided_slice %204 {offsets = [0, 96], sizes = [8, 32], strides = [1, 1]} : vector<8x128xf32> to vector<8x32xf32>
    %209 = arith.mulf %206, %172 : vector<8x32xf32>
    %210 = arith.mulf %205, %207 : vector<8x32xf32>
    %211 = arith.addf %209, %210 : vector<8x32xf32>
    %212 = math.tanh %211 : vector<8x32xf32>
    %213 = arith.mulf %208, %212 : vector<8x32xf32>
    %214 = vector.extract_strided_slice %6 {offsets = [40, 0], sizes = [8, 128], strides = [1, 1]} : vector<64x128xf32> to vector<8x128xf32>
    %215 = tpu.concatenate %194, %213 in 1 : vector<8x32xf32>, vector<8x32xf32> -> vector<8x64xf32>
    %cst_43 = arith.constant dense<0.000000e+00> : vector<8x256xf32>
    %216 = tpu.matmul %215, %7, %cst_43 {dimension_numbers = #tpu.dot_dimension_numbers<[1], [0], [0], [1], [0, 0, 1, 1], [], []>} : vector<8x64xf32>, vector<64x256xf32>, vector<8x256xf32> -> vector<8x256xf32>
    %217 = vector.extract_strided_slice %216 {offsets = [0, 0], sizes = [8, 128], strides = [1, 1]} : vector<8x256xf32> to vector<8x128xf32>
    %218 = arith.addf %214, %217 : vector<8x128xf32>
    %219 = math.tanh %218 : vector<8x128xf32>
    %cst_44 = arith.constant 5.000000e-01 : f32
    %220 = vector.broadcast %cst_44 : f32 to vector<8x128xf32>
    %221 = arith.mulf %220, %219 : vector<8x128xf32>
    %cst_45 = arith.constant 5.000000e-01 : f32
    %222 = vector.broadcast %cst_45 : f32 to vector<8x128xf32>
    %223 = arith.addf %221, %222 : vector<8x128xf32>
    %224 = arith.select %17, %219, %223 : vector<8x128xi1>, vector<8x128xf32>
    %225 = vector.extract_strided_slice %224 {offsets = [0, 0], sizes = [8, 32], strides = [1, 1]} : vector<8x128xf32> to vector<8x32xf32>
    %226 = vector.extract_strided_slice %224 {offsets = [0, 32], sizes = [8, 32], strides = [1, 1]} : vector<8x128xf32> to vector<8x32xf32>
    %227 = vector.extract_strided_slice %224 {offsets = [0, 64], sizes = [8, 32], strides = [1, 1]} : vector<8x128xf32> to vector<8x32xf32>
    %228 = vector.extract_strided_slice %224 {offsets = [0, 96], sizes = [8, 32], strides = [1, 1]} : vector<8x128xf32> to vector<8x32xf32>
    %229 = arith.mulf %226, %192 : vector<8x32xf32>
    %230 = arith.mulf %225, %227 : vector<8x32xf32>
    %231 = arith.addf %229, %230 : vector<8x32xf32>
    %232 = math.tanh %231 : vector<8x32xf32>
    %233 = arith.mulf %228, %232 : vector<8x32xf32>
    %cst_46 = arith.constant dense<0.000000e+00> : vector<8x128xf32>
    %234 = tpu.matmul %233, %8, %cst_46 {dimension_numbers = #tpu.dot_dimension_numbers<[1], [0], [0], [1], [0, 0, 1, 1], [], []>} : vector<8x32xf32>, vector<32x128xf32>, vector<8x128xf32> -> vector<8x128xf32>
    %235 = vector.extract_strided_slice %216 {offsets = [0, 128], sizes = [8, 128], strides = [1, 1]} : vector<8x256xf32> to vector<8x128xf32>
    %236 = arith.addf %234, %235 : vector<8x128xf32>
    %237 = arith.addf %236, %11 : vector<8x128xf32>
    %238 = math.tanh %237 : vector<8x128xf32>
    %cst_47 = arith.constant 5.000000e-01 : f32
    %239 = vector.broadcast %cst_47 : f32 to vector<8x128xf32>
    %240 = arith.mulf %239, %238 : vector<8x128xf32>
    %cst_48 = arith.constant 5.000000e-01 : f32
    %241 = vector.broadcast %cst_48 : f32 to vector<8x128xf32>
    %242 = arith.addf %240, %241 : vector<8x128xf32>
    %243 = arith.select %17, %238, %242 : vector<8x128xi1>, vector<8x128xf32>
    %244 = vector.extract_strided_slice %243 {offsets = [0, 0], sizes = [8, 32], strides = [1, 1]} : vector<8x128xf32> to vector<8x32xf32>
    %245 = vector.extract_strided_slice %243 {offsets = [0, 32], sizes = [8, 32], strides = [1, 1]} : vector<8x128xf32> to vector<8x32xf32>
    %246 = vector.extract_strided_slice %243 {offsets = [0, 64], sizes = [8, 32], strides = [1, 1]} : vector<8x128xf32> to vector<8x32xf32>
    %247 = vector.extract_strided_slice %243 {offsets = [0, 96], sizes = [8, 32], strides = [1, 1]} : vector<8x128xf32> to vector<8x32xf32>
    %248 = arith.mulf %245, %211 : vector<8x32xf32>
    %249 = arith.mulf %244, %246 : vector<8x32xf32>
    %250 = arith.addf %248, %249 : vector<8x32xf32>
    %251 = math.tanh %250 : vector<8x32xf32>
    %252 = arith.mulf %247, %251 : vector<8x32xf32>
    %253 = vector.extract_strided_slice %6 {offsets = [48, 0], sizes = [8, 128], strides = [1, 1]} : vector<64x128xf32> to vector<8x128xf32>
    %254 = tpu.concatenate %233, %252 in 1 : vector<8x32xf32>, vector<8x32xf32> -> vector<8x64xf32>
    %cst_49 = arith.constant dense<0.000000e+00> : vector<8x256xf32>
    %255 = tpu.matmul %254, %7, %cst_49 {dimension_numbers = #tpu.dot_dimension_numbers<[1], [0], [0], [1], [0, 0, 1, 1], [], []>} : vector<8x64xf32>, vector<64x256xf32>, vector<8x256xf32> -> vector<8x256xf32>
    %256 = vector.extract_strided_slice %255 {offsets = [0, 0], sizes = [8, 128], strides = [1, 1]} : vector<8x256xf32> to vector<8x128xf32>
    %257 = arith.addf %253, %256 : vector<8x128xf32>
    %258 = math.tanh %257 : vector<8x128xf32>
    %cst_50 = arith.constant 5.000000e-01 : f32
    %259 = vector.broadcast %cst_50 : f32 to vector<8x128xf32>
    %260 = arith.mulf %259, %258 : vector<8x128xf32>
    %cst_51 = arith.constant 5.000000e-01 : f32
    %261 = vector.broadcast %cst_51 : f32 to vector<8x128xf32>
    %262 = arith.addf %260, %261 : vector<8x128xf32>
    %263 = arith.select %17, %258, %262 : vector<8x128xi1>, vector<8x128xf32>
    %264 = vector.extract_strided_slice %263 {offsets = [0, 0], sizes = [8, 32], strides = [1, 1]} : vector<8x128xf32> to vector<8x32xf32>
    %265 = vector.extract_strided_slice %263 {offsets = [0, 32], sizes = [8, 32], strides = [1, 1]} : vector<8x128xf32> to vector<8x32xf32>
    %266 = vector.extract_strided_slice %263 {offsets = [0, 64], sizes = [8, 32], strides = [1, 1]} : vector<8x128xf32> to vector<8x32xf32>
    %267 = vector.extract_strided_slice %263 {offsets = [0, 96], sizes = [8, 32], strides = [1, 1]} : vector<8x128xf32> to vector<8x32xf32>
    %268 = arith.mulf %265, %231 : vector<8x32xf32>
    %269 = arith.mulf %264, %266 : vector<8x32xf32>
    %270 = arith.addf %268, %269 : vector<8x32xf32>
    %271 = math.tanh %270 : vector<8x32xf32>
    %272 = arith.mulf %267, %271 : vector<8x32xf32>
    %cst_52 = arith.constant dense<0.000000e+00> : vector<8x128xf32>
    %273 = tpu.matmul %272, %8, %cst_52 {dimension_numbers = #tpu.dot_dimension_numbers<[1], [0], [0], [1], [0, 0, 1, 1], [], []>} : vector<8x32xf32>, vector<32x128xf32>, vector<8x128xf32> -> vector<8x128xf32>
    %274 = vector.extract_strided_slice %255 {offsets = [0, 128], sizes = [8, 128], strides = [1, 1]} : vector<8x256xf32> to vector<8x128xf32>
    %275 = arith.addf %273, %274 : vector<8x128xf32>
    %276 = arith.addf %275, %11 : vector<8x128xf32>
    %277 = math.tanh %276 : vector<8x128xf32>
    %cst_53 = arith.constant 5.000000e-01 : f32
    %278 = vector.broadcast %cst_53 : f32 to vector<8x128xf32>
    %279 = arith.mulf %278, %277 : vector<8x128xf32>
    %cst_54 = arith.constant 5.000000e-01 : f32
    %280 = vector.broadcast %cst_54 : f32 to vector<8x128xf32>
    %281 = arith.addf %279, %280 : vector<8x128xf32>
    %282 = arith.select %17, %277, %281 : vector<8x128xi1>, vector<8x128xf32>
    %283 = vector.extract_strided_slice %282 {offsets = [0, 0], sizes = [8, 32], strides = [1, 1]} : vector<8x128xf32> to vector<8x32xf32>
    %284 = vector.extract_strided_slice %282 {offsets = [0, 32], sizes = [8, 32], strides = [1, 1]} : vector<8x128xf32> to vector<8x32xf32>
    %285 = vector.extract_strided_slice %282 {offsets = [0, 64], sizes = [8, 32], strides = [1, 1]} : vector<8x128xf32> to vector<8x32xf32>
    %286 = vector.extract_strided_slice %282 {offsets = [0, 96], sizes = [8, 32], strides = [1, 1]} : vector<8x128xf32> to vector<8x32xf32>
    %287 = arith.mulf %284, %250 : vector<8x32xf32>
    %288 = arith.mulf %283, %285 : vector<8x32xf32>
    %289 = arith.addf %287, %288 : vector<8x32xf32>
    %290 = math.tanh %289 : vector<8x32xf32>
    %291 = arith.mulf %286, %290 : vector<8x32xf32>
    %292 = vector.extract_strided_slice %6 {offsets = [56, 0], sizes = [8, 128], strides = [1, 1]} : vector<64x128xf32> to vector<8x128xf32>
    %293 = tpu.concatenate %272, %291 in 1 : vector<8x32xf32>, vector<8x32xf32> -> vector<8x64xf32>
    %cst_55 = arith.constant dense<0.000000e+00> : vector<8x256xf32>
    %294 = tpu.matmul %293, %7, %cst_55 {dimension_numbers = #tpu.dot_dimension_numbers<[1], [0], [0], [1], [0, 0, 1, 1], [], []>} : vector<8x64xf32>, vector<64x256xf32>, vector<8x256xf32> -> vector<8x256xf32>
    %295 = vector.extract_strided_slice %294 {offsets = [0, 0], sizes = [8, 128], strides = [1, 1]} : vector<8x256xf32> to vector<8x128xf32>
    %296 = arith.addf %292, %295 : vector<8x128xf32>
    %297 = math.tanh %296 : vector<8x128xf32>
    %cst_56 = arith.constant 5.000000e-01 : f32
    %298 = vector.broadcast %cst_56 : f32 to vector<8x128xf32>
    %299 = arith.mulf %298, %297 : vector<8x128xf32>
    %cst_57 = arith.constant 5.000000e-01 : f32
    %300 = vector.broadcast %cst_57 : f32 to vector<8x128xf32>
    %301 = arith.addf %299, %300 : vector<8x128xf32>
    %302 = arith.select %17, %297, %301 : vector<8x128xi1>, vector<8x128xf32>
    %303 = vector.extract_strided_slice %302 {offsets = [0, 0], sizes = [8, 32], strides = [1, 1]} : vector<8x128xf32> to vector<8x32xf32>
    %304 = vector.extract_strided_slice %302 {offsets = [0, 32], sizes = [8, 32], strides = [1, 1]} : vector<8x128xf32> to vector<8x32xf32>
    %305 = vector.extract_strided_slice %302 {offsets = [0, 64], sizes = [8, 32], strides = [1, 1]} : vector<8x128xf32> to vector<8x32xf32>
    %306 = vector.extract_strided_slice %302 {offsets = [0, 96], sizes = [8, 32], strides = [1, 1]} : vector<8x128xf32> to vector<8x32xf32>
    %307 = arith.mulf %304, %270 : vector<8x32xf32>
    %308 = arith.mulf %303, %305 : vector<8x32xf32>
    %309 = arith.addf %307, %308 : vector<8x32xf32>
    %310 = math.tanh %309 : vector<8x32xf32>
    %311 = arith.mulf %306, %310 : vector<8x32xf32>
    %cst_58 = arith.constant dense<0.000000e+00> : vector<8x128xf32>
    %312 = tpu.matmul %311, %8, %cst_58 {dimension_numbers = #tpu.dot_dimension_numbers<[1], [0], [0], [1], [0, 0, 1, 1], [], []>} : vector<8x32xf32>, vector<32x128xf32>, vector<8x128xf32> -> vector<8x128xf32>
    %313 = vector.extract_strided_slice %294 {offsets = [0, 128], sizes = [8, 128], strides = [1, 1]} : vector<8x256xf32> to vector<8x128xf32>
    %314 = arith.addf %312, %313 : vector<8x128xf32>
    %315 = arith.addf %314, %11 : vector<8x128xf32>
    %316 = math.tanh %315 : vector<8x128xf32>
    %cst_59 = arith.constant 5.000000e-01 : f32
    %317 = vector.broadcast %cst_59 : f32 to vector<8x128xf32>
    %318 = arith.mulf %317, %316 : vector<8x128xf32>
    %cst_60 = arith.constant 5.000000e-01 : f32
    %319 = vector.broadcast %cst_60 : f32 to vector<8x128xf32>
    %320 = arith.addf %318, %319 : vector<8x128xf32>
    %321 = arith.select %17, %316, %320 : vector<8x128xi1>, vector<8x128xf32>
    %322 = vector.extract_strided_slice %321 {offsets = [0, 0], sizes = [8, 32], strides = [1, 1]} : vector<8x128xf32> to vector<8x32xf32>
    %323 = vector.extract_strided_slice %321 {offsets = [0, 32], sizes = [8, 32], strides = [1, 1]} : vector<8x128xf32> to vector<8x32xf32>
    %324 = vector.extract_strided_slice %321 {offsets = [0, 64], sizes = [8, 32], strides = [1, 1]} : vector<8x128xf32> to vector<8x32xf32>
    %325 = vector.extract_strided_slice %321 {offsets = [0, 96], sizes = [8, 32], strides = [1, 1]} : vector<8x128xf32> to vector<8x32xf32>
    %326 = arith.mulf %323, %289 : vector<8x32xf32>
    %327 = arith.mulf %322, %324 : vector<8x32xf32>
    %328 = arith.addf %326, %327 : vector<8x32xf32>
    %329 = math.tanh %328 : vector<8x32xf32>
    %330 = arith.mulf %325, %329 : vector<8x32xf32>
    %c0_61 = arith.constant 0 : index
    %c0_62 = arith.constant 0 : index
    %331 = vector.load %arg7[%c0_61, %c0_62] : memref<32x128xf32, #tpu.memory_space<vmem>>, vector<32x128xf32>
    %cst_63 = arith.constant dense<0.000000e+00> : vector<8x128xf32>
    %332 = tpu.matmul %330, %331, %cst_63 {dimension_numbers = #tpu.dot_dimension_numbers<[1], [0], [0], [1], [0, 0, 1, 1], [], []>} : vector<8x32xf32>, vector<32x128xf32>, vector<8x128xf32> -> vector<8x128xf32>
    %c0_64 = arith.constant 0 : index
    %c0_65 = arith.constant 0 : index
    %333 = vector.load %arg8[%c0_64, %c0_65] : memref<1x128xf32, #tpu.memory_space<vmem>>, vector<1x128xf32>
    %334 = vector.broadcast %333 : vector<1x128xf32> to vector<8x128xf32>
    %335 = arith.addf %332, %334 : vector<8x128xf32>
    %cst_66 = arith.constant 0.000000e+00 : f32
    %336 = vector.broadcast %cst_66 : f32 to vector<8x128xf32>
    %337 = arith.maximumf %335, %336 : vector<8x128xf32>
    %c0_67 = arith.constant 0 : index
    %c0_68 = arith.constant 0 : index
    %338 = vector.load %arg9[%c0_67, %c0_68] : memref<128x128xf32, #tpu.memory_space<vmem>>, vector<128x128xf32>
    %cst_69 = arith.constant dense<0.000000e+00> : vector<8x128xf32>
    %339 = tpu.matmul %337, %338, %cst_69 {dimension_numbers = #tpu.dot_dimension_numbers<[1], [0], [0], [1], [0, 0, 1, 1], [], []>} : vector<8x128xf32>, vector<128x128xf32>, vector<8x128xf32> -> vector<8x128xf32>
    %c0_70 = arith.constant 0 : index
    %c0_71 = arith.constant 0 : index
    %340 = vector.load %arg10[%c0_70, %c0_71] : memref<1x128xf32, #tpu.memory_space<vmem>>, vector<1x128xf32>
    %341 = vector.broadcast %340 : vector<1x128xf32> to vector<8x128xf32>
    %342 = arith.addf %339, %341 : vector<8x128xf32>
    %cst_72 = arith.constant 0.000000e+00 : f32
    %343 = vector.broadcast %cst_72 : f32 to vector<8x128xf32>
    %344 = arith.maximumf %342, %343 : vector<8x128xf32>
    %c0_73 = arith.constant 0 : index
    %c0_74 = arith.constant 0 : index
    %345 = vector.load %arg11[%c0_73, %c0_74] : memref<128x128xf32, #tpu.memory_space<vmem>>, vector<128x128xf32>
    %cst_75 = arith.constant dense<0.000000e+00> : vector<8x128xf32>
    %346 = tpu.matmul %344, %345, %cst_75 {dimension_numbers = #tpu.dot_dimension_numbers<[1], [0], [0], [1], [0, 0, 1, 1], [], []>} : vector<8x128xf32>, vector<128x128xf32>, vector<8x128xf32> -> vector<8x128xf32>
    %c0_76 = arith.constant 0 : index
    %c0_77 = arith.constant 0 : index
    %347 = vector.load %arg12[%c0_76, %c0_77] : memref<1x128xf32, #tpu.memory_space<vmem>>, vector<1x128xf32>
    %348 = vector.broadcast %347 : vector<1x128xf32> to vector<8x128xf32>
    %349 = arith.addf %346, %348 : vector<8x128xf32>
    %c0_78 = arith.constant 0 : index
    %c0_79 = arith.constant 0 : index
    %350 = vector.load %arg13[%c0_78, %c0_79] : memref<8x128xf32, #tpu.memory_space<vmem>>, vector<8x128xf32>
    tpu.vector_store %arg13[%c0_78, %c0_79], %349 {strides = array<i32>} : memref<8x128xf32, #tpu.memory_space<vmem>>, vector<8x128xf32>,
    return
  }
  func.func @transform_0(%arg0: i32) -> (i32, i32, i32) {
    %c0_i32 = arith.constant 0 : i32
    %c0_i32_0 = arith.constant 0 : i32
    %c0_i32_1 = arith.constant 0 : i32
    return %c0_i32, %arg0, %c0_i32_0 : i32, i32, i32
  }
  func.func @transform_1(%arg0: i32) -> (i32, i32) {
    %c0_i32 = arith.constant 0 : i32
    %c0_i32_0 = arith.constant 0 : i32
    %c0_i32_1 = arith.constant 0 : i32
    return %c0_i32, %c0_i32_0 : i32, i32
  }
  func.func @transform_2(%arg0: i32) -> (i32, i32) {
    %c0_i32 = arith.constant 0 : i32
    %c0_i32_0 = arith.constant 0 : i32
    %c0_i32_1 = arith.constant 0 : i32
    return %c0_i32, %c0_i32_0 : i32, i32
  }
  func.func @transform_3(%arg0: i32) -> (i32, i32) {
    %c0_i32 = arith.constant 0 : i32
    %c0_i32_0 = arith.constant 0 : i32
    %c0_i32_1 = arith.constant 0 : i32
    return %c0_i32, %c0_i32_0 : i32, i32
  }
  func.func @transform_4(%arg0: i32) -> (i32, i32) {
    %c0_i32 = arith.constant 0 : i32
    %c0_i32_0 = arith.constant 0 : i32
    %c0_i32_1 = arith.constant 0 : i32
    return %c0_i32, %c0_i32_0 : i32, i32
  }
  func.func @transform_5(%arg0: i32) -> (i32, i32) {
    %c0_i32 = arith.constant 0 : i32
    %c0_i32_0 = arith.constant 0 : i32
    %c0_i32_1 = arith.constant 0 : i32
    return %c0_i32, %c0_i32_0 : i32, i32
  }
  func.func @transform_6(%arg0: i32) -> (i32, i32) {
    %c0_i32 = arith.constant 0 : i32
    %c0_i32_0 = arith.constant 0 : i32
    %c0_i32_1 = arith.constant 0 : i32
    return %c0_i32, %c0_i32_0 : i32, i32
  }
  func.func @transform_7(%arg0: i32) -> (i32, i32) {
    %c0_i32 = arith.constant 0 : i32
    %c0_i32_0 = arith.constant 0 : i32
    %c0_i32_1 = arith.constant 0 : i32
    return %c0_i32, %c0_i32_0 : i32, i32
  }
  func.func @transform_8(%arg0: i32) -> (i32, i32) {
    %c0_i32 = arith.constant 0 : i32
    %c0_i32_0 = arith.constant 0 : i32
    %c0_i32_1 = arith.constant 0 : i32
    return %c0_i32, %c0_i32_0 : i32, i32
  }
  func.func @transform_9(%arg0: i32) -> (i32, i32) {
    %c0_i32 = arith.constant 0 : i32
    %c0_i32_0 = arith.constant 0 : i32
    %c0_i32_1 = arith.constant 0 : i32
    return %c0_i32, %c0_i32_0 : i32, i32
  }
  func.func @transform_10(%arg0: i32) -> (i32, i32) {
    %c0_i32 = arith.constant 0 : i32
    %c0_i32_0 = arith.constant 0 : i32
    %c0_i32_1 = arith.constant 0 : i32
    return %c0_i32, %c0_i32_0 : i32, i32
  }
  func.func @transform_11(%arg0: i32) -> (i32, i32) {
    %c0_i32 = arith.constant 0 : i32
    %c0_i32_0 = arith.constant 0 : i32
    %c0_i32_1 = arith.constant 0 : i32
    return %c0_i32, %c0_i32_0 : i32, i32
  }
  func.func @transform_12(%arg0: i32) -> (i32, i32) {
    %c0_i32 = arith.constant 0 : i32
    %c0_i32_0 = arith.constant 0 : i32
    return %arg0, %c0_i32 : i32, i32
  }
}

</mosaic_0001>

<llo_original>
// kernel: rnn_model_forward.1
$region0: #{rnn_model_forward.1}
  #allocation0 [shape = 'u32[]', space=smem, size = 0x4, offset = 0x4, fixed_abs, tag = 'smem constant byte address 0x4 - core index']
  #allocation1 [shape = 'u32[144,128]{1,0:T(1,128)}', space=vmem, size = 0x12000, scoped, tag = 'internal scratch']
  %s0 = inlined_call_operand.vmem [shape: f32[8,8,16], index: 0, kind: input, shape index: {}]
  %s1 = inlined_call_operand.vmem [shape: f32[16,128], index: 1, kind: input, shape index: {}]
  %s2 = inlined_call_operand.vmem [shape: f32[64,256], index: 2, kind: input, shape index: {}]
  %s3 = inlined_call_operand.vmem [shape: f32[1,128], index: 3, kind: input, shape index: {}]
  %s4 = inlined_call_operand.vmem [shape: f32[32,128], index: 4, kind: input, shape index: {}]
  %s5 = inlined_call_operand.vmem [shape: f32[1,128], index: 5, kind: input, shape index: {}]
  %s6 = inlined_call_operand.vmem [shape: f32[32,128], index: 6, kind: input, shape index: {}]
  %s7 = inlined_call_operand.vmem [shape: f32[1,128], index: 7, kind: input, shape index: {}]
  %s8 = inlined_call_operand.vmem [shape: f32[128,128], index: 8, kind: input, shape index: {}]
  %s9 = inlined_call_operand.vmem [shape: f32[1,128], index: 9, kind: input, shape index: {}]
  %s10 = inlined_call_operand.vmem [shape: f32[128,128], index: 10, kind: input, shape index: {}]
  %s11 = inlined_call_operand.vmem [shape: f32[1,128], index: 11, kind: input, shape index: {}]
  %s12 = inlined_call_operand.vmem [shape: f32[8,128], index: 12, kind: output, shape index: {}]
  %s13 = sld [smem:[#allocation0]]
  $region58: #{rnn_model_forward.1} parent=0
    _
  %s15 = ssub.s32 1, %s13
  %s16 = scalar_select 0, %s15, %s13
  // Predicated region
  $region2: #{rnn_model_forward.1} parent=0 // pred_check
    _
  $region3: #{rnn_model_forward.1} parent=0 // pred_check_branch
    %18 = sbr.rel (0) target = $region5
  $region4: #{rnn_model_forward.1} parent=0 // pred_region
    _
  $region5: #{rnn_model_forward.1} parent=0 // pred_fallthru
    _
  // Predicated region
  $region6: #{rnn_model_forward.1} parent=0 // pred_check
    _
  $region7: #{rnn_model_forward.1} parent=0 // pred_check_branch
    %20 = sbr.rel (0) target = $region9
  $region8: #{rnn_model_forward.1} parent=0 // pred_region
    _
  $region9: #{rnn_model_forward.1} parent=0 // pred_fallthru
    _
  // Predicated region
  $region10: #{rnn_model_forward.1} parent=0 // pred_check
    _
  $region11: #{rnn_model_forward.1} parent=0 // pred_check_branch
    %22 = sbr.rel (0) target = $region13
  $region12: #{rnn_model_forward.1} parent=0 // pred_region
    _
  $region13: #{rnn_model_forward.1} parent=0 // pred_fallthru
    _
  // Predicated region
  $region14: #{rnn_model_forward.1} parent=0 // pred_check
    _
  $region15: #{rnn_model_forward.1} parent=0 // pred_check_branch
    %24 = sbr.rel (0) target = $region17
  $region16: #{rnn_model_forward.1} parent=0 // pred_region
    _
  $region17: #{rnn_model_forward.1} parent=0 // pred_fallthru
    _
  // Predicated region
  $region18: #{rnn_model_forward.1} parent=0 // pred_check
    _
  $region19: #{rnn_model_forward.1} parent=0 // pred_check_branch
    %26 = sbr.rel (0) target = $region21
  $region20: #{rnn_model_forward.1} parent=0 // pred_region
    _
  $region21: #{rnn_model_forward.1} parent=0 // pred_fallthru
    _
  // Predicated region
  $region22: #{rnn_model_forward.1} parent=0 // pred_check
    _
  $region23: #{rnn_model_forward.1} parent=0 // pred_check_branch
    %28 = sbr.rel (0) target = $region25
  $region24: #{rnn_model_forward.1} parent=0 // pred_region
    _
  $region25: #{rnn_model_forward.1} parent=0 // pred_fallthru
    _
  // Predicated region
  $region26: #{rnn_model_forward.1} parent=0 // pred_check
    _
  $region27: #{rnn_model_forward.1} parent=0 // pred_check_branch
    %30 = sbr.rel (0) target = $region29
  $region28: #{rnn_model_forward.1} parent=0 // pred_region
    _
  $region29: #{rnn_model_forward.1} parent=0 // pred_fallthru
    _
  // Predicated region
  $region30: #{rnn_model_forward.1} parent=0 // pred_check
    _
  $region31: #{rnn_model_forward.1} parent=0 // pred_check_branch
    %32 = sbr.rel (0) target = $region33
  $region32: #{rnn_model_forward.1} parent=0 // pred_region
    _
  $region33: #{rnn_model_forward.1} parent=0 // pred_fallthru
    _
  // Predicated region
  $region34: #{rnn_model_forward.1} parent=0 // pred_check
    _
  $region35: #{rnn_model_forward.1} parent=0 // pred_check_branch
    %34 = sbr.rel (0) target = $region37
  $region36: #{rnn_model_forward.1} parent=0 // pred_region
    _
  $region37: #{rnn_model_forward.1} parent=0 // pred_fallthru
    _
  // Predicated region
  $region38: #{rnn_model_forward.1} parent=0 // pred_check
    _
  $region39: #{rnn_model_forward.1} parent=0 // pred_check_branch
    %36 = sbr.rel (0) target = $region41
  $region40: #{rnn_model_forward.1} parent=0 // pred_region
    _
  $region41: #{rnn_model_forward.1} parent=0 // pred_fallthru
    _
  // Predicated region
  $region42: #{rnn_model_forward.1} parent=0 // pred_check
    _
  $region43: #{rnn_model_forward.1} parent=0 // pred_check_branch
    %38 = sbr.rel (0) target = $region45
  $region44: #{rnn_model_forward.1} parent=0 // pred_region
    _
  $region45: #{rnn_model_forward.1} parent=0 // pred_fallthru
    _
  // Predicated region
  $region46: #{rnn_model_forward.1} parent=0 // pred_check
    _
  $region47: #{rnn_model_forward.1} parent=0 // pred_check_branch
    %40 = sbr.rel (0) target = $region49
  $region48: #{rnn_model_forward.1} parent=0 // pred_region
    _
  $region49: #{rnn_model_forward.1} parent=0 // pred_fallthru
    _
  %v41 = vld [vmem:[%s0] sm:$0xff]
  %v42 = vld [vmem:[%s0 + $0x8] sm:$0xff]
  %v43 = vld [vmem:[%s0 + $0x10] sm:$0xff]
  %v44 = vld [vmem:[%s0 + $0x18] sm:$0xff]
  %v45 = vld [vmem:[%s0 + $0x20] sm:$0xff]
  %v46 = vld [vmem:[%s0 + $0x28] sm:$0xff]
  %v47 = vld [vmem:[%s0 + $0x30] sm:$0xff]
  %v48 = vld [vmem:[%s0 + $0x38] sm:$0xff]
  %v49 = vld [vmem:[%s1] sm:$0xff]
  %v50 = vld [vmem:[%s1 + $0x8] sm:$0xff]
  %v51 = vld [vmem:[%s3] sm:$0x1]
  %v53 = vlaneseq
  %v54 = vshrl.u32 %v53, 7
  %v55 = vsub.s32 0, %v54
  %v56 = vrot.slane %v51, %v55
  %vm58 = vcmask 130048
  %v60 = vsel %vm58, %v41, 0
  %v63 = vsel %vm58, %v42, 0
  %v66 = vsel %vm58, %v43, 0
  %v69 = vsel %vm58, %v44, 0
  %v72 = vsel %vm58, %v45, 0
  %v75 = vsel %vm58, %v46, 0
  %v78 = vsel %vm58, %v47, 0
  %v81 = vsel %vm58, %v48, 0
  %83 = vmatprep.subr.mxu0 0.0
  %84 = vmatpush1.msra.mxu0 %v49
  %85 = vmatprep.subr.mxu0 0.0
  %86 = vmatpush1.msra.mxu0 %v50
  %87 = vmatprep.subr.mxu0 0.0
  %88 = vmatpush1.msra.mxu0 0.0
  %89 = vmatprep.subr.mxu0 0.0
  %90 = vmatpush1.msra.mxu0 0.0
  %91 = vmatprep.subr.mxu0 0.0
  %92 = vmatpush1.msra.mxu0 0.0
  %93 = vmatprep.subr.mxu0 0.0
  %94 = vmatpush1.msra.mxu0 0.0
  %95 = vmatprep.subr.mxu0 0.0
  %96 = vmatpush1.msra.mxu0 0.0
  %97 = vmatprep.subr.mxu0 0.0
  %98 = vmatpush1.msra.mxu0 0.0
  %99 = vmatprep.subr.mxu0 0.0
  %100 = vmatpush1.msra.mxu0 0.0
  %101 = vmatprep.subr.mxu0 0.0
  %102 = vmatpush1.msra.mxu0 0.0
  %103 = vmatprep.subr.mxu0 0.0
  %104 = vmatpush1.msra.mxu0 0.0
  %105 = vmatprep.subr.mxu0 0.0
  %106 = vmatpush1.msra.mxu0 0.0
  %107 = vmatprep.subr.mxu0 0.0
  %108 = vmatpush1.msra.mxu0 0.0
  %109 = vmatprep.subr.mxu0 0.0
  %110 = vmatpush1.msra.mxu0 0.0
  %111 = vmatprep.subr.mxu0 0.0
  %112 = vmatpush1.msra.mxu0 0.0
  %113 = vmatprep.subr.mxu0 0.0
  %114 = vmatpush1.msra.mxu0 0.0
  %115 = vmatprep.subr.mxu0 0.0
  %116 = vmatpush1.msra.mxu0 0.0
  %117 = vmatprep.subr.mxu0 0.0
  %118 = vmatpush1.msra.mxu0 0.0
  %119 = vmatprep.subr.mxu0 0.0
  %120 = vmatpush1.msra.mxu0 0.0
  %121 = vmatprep.subr.mxu0 0.0
  %122 = vmatpush1.msra.mxu0 0.0
  %123 = vmatprep.subr.mxu0 0.0
  %124 = vmatpush1.msra.mxu0 0.0
  %125 = vmatprep.subr.mxu0 0.0
  %126 = vmatpush1.msra.mxu0 0.0
  %127 = vmatprep.subr.mxu0 0.0
  %128 = vmatpush1.msra.mxu0 0.0
  %129 = vmatprep.subr.mxu0 0.0
  %130 = vmatpush1.msra.mxu0 0.0
  %131 = vmatprep.subr.mxu0 0.0
  %132 = vmatpush1.msra.mxu0 0.0
  %133 = vmatprep.subr.mxu0 0.0
  %134 = vmatpush1.msra.mxu0 0.0
  %135 = vmatprep.subr.mxu0 0.0
  %136 = vmatpush1.msra.mxu0 0.0
  %137 = vmatprep.subr.mxu0 0.0
  %138 = vmatpush1.msra.mxu0 0.0
  %139 = vmatprep.subr.mxu0 0.0
  %140 = vmatpush1.msra.mxu0 0.0
  %141 = vmatprep.subr.mxu0 0.0
  %142 = vmatpush1.msra.mxu0 0.0
  %143 = vmatprep.subr.mxu0 0.0
  %144 = vmatpush1.msra.mxu0 0.0
  %145 = vmatprep.subr.mxu0 0.0
  %146 = vmatpush1.msra.mxu0 0.0
  %147 = vmatprep.mubr.f32.mxu0 0.0
  %148 = vmatmul.mubr.f32.gmra.mrb[0].mxu0 %v60
  %v149 = vpop.f32.mrb[0].mxu0
  %v150 = vadd.f32 %v56, %v149
  %v151 = vpop.f32.mrb[0].mxu0
  %152 = vmatprep.mubr.f32.mxu0 0.0
  %153 = vmatmul.mubr.f32.gmra.mrb[0].mxu0 %v63
  %v154 = vpop.f32.mrb[0].mxu0
  %v155 = vadd.f32 %v56, %v154
  %v156 = vpop.f32.mrb[0].mxu0
  %157 = vmatprep.mubr.f32.mxu0 0.0
  %158 = vmatmul.mubr.f32.gmra.mrb[0].mxu0 %v66
  %v159 = vpop.f32.mrb[0].mxu0
  %v160 = vadd.f32 %v56, %v159
  %v161 = vpop.f32.mrb[0].mxu0
  %162 = vmatprep.mubr.f32.mxu0 0.0
  %163 = vmatmul.mubr.f32.gmra.mrb[0].mxu0 %v69
  %v164 = vpop.f32.mrb[0].mxu0
  %v165 = vadd.f32 %v56, %v164
  %v166 = vpop.f32.mrb[0].mxu0
  %167 = vmatprep.mubr.f32.mxu0 0.0
  %168 = vmatmul.mubr.f32.gmra.mrb[0].mxu0 %v72
  %v169 = vpop.f32.mrb[0].mxu0
  %v170 = vadd.f32 %v56, %v169
  %v171 = vpop.f32.mrb[0].mxu0
  %172 = vmatprep.mubr.f32.mxu0 0.0
  %173 = vmatmul.mubr.f32.gmra.mrb[0].mxu0 %v75
  %v174 = vpop.f32.mrb[0].mxu0
  %v175 = vadd.f32 %v56, %v174
  %v176 = vpop.f32.mrb[0].mxu0
  %177 = vmatprep.mubr.f32.mxu0 0.0
  %178 = vmatmul.mubr.f32.gmra.mrb[0].mxu0 %v78
  %v179 = vpop.f32.mrb[0].mxu0
  %v180 = vadd.f32 %v56, %v179
  %v181 = vpop.f32.mrb[0].mxu0
  %182 = vmatprep.mubr.f32.mxu0 0.0
  %183 = vmatmul.mubr.f32.gmra.mrb[0].mxu0 %v81
  %v184 = vpop.f32.mrb[0].mxu0
  %v185 = vadd.f32 %v56, %v184
  %v186 = vpop.f32.mrb[0].mxu0
  %187 = vdwg.mxu0
  %v188 = vld [vmem:[%s2] sm:$0xff]
  %v189 = vld [vmem:[%s2 + $0x8] sm:$0xff]
  %v190 = vld [vmem:[%s2 + $0x10] sm:$0xff]
  %v191 = vld [vmem:[%s2 + $0x18] sm:$0xff]
  %v192 = vld [vmem:[%s2 + $0x20] sm:$0xff]
  %v193 = vld [vmem:[%s2 + $0x28] sm:$0xff]
  %v194 = vld [vmem:[%s2 + $0x30] sm:$0xff]
  %v195 = vld [vmem:[%s2 + $0x38] sm:$0xff]
  %v196 = vld [vmem:[%s2 + $0x40] sm:$0xff]
  %v197 = vld [vmem:[%s2 + $0x48] sm:$0xff]
  %v198 = vld [vmem:[%s2 + $0x50] sm:$0xff]
  %v199 = vld [vmem:[%s2 + $0x58] sm:$0xff]
  %v200 = vld [vmem:[%s2 + $0x60] sm:$0xff]
  %v201 = vld [vmem:[%s2 + $0x68] sm:$0xff]
  %v202 = vld [vmem:[%s2 + $0x70] sm:$0xff]
  %v203 = vld [vmem:[%s2 + $0x78] sm:$0xff]
  %v204 = vld [vmem:[%s4] sm:$0xff]
  %v205 = vld [vmem:[%s4 + $0x8] sm:$0xff]
  %v206 = vld [vmem:[%s4 + $0x10] sm:$0xff]
  %v207 = vld [vmem:[%s4 + $0x18] sm:$0xff]
  %v208 = vld [vmem:[%s5] sm:$0x1]
  %v210 = vlaneseq
  %v211 = vshrl.u32 %v210, 7
  %v212 = vsub.s32 0, %v211
  %v213 = vrot.slane %v208, %v212
  %v215 = vlaneseq
  %v216 = vand.u32 %v215, 127
  %vm217 = vcmp.ge.s32.totalorder %v216, 64
  %vm218 = vcmp.lt.s32.totalorder %v216, 96
  %vm219 = vmand %vm217, %vm218
  %vm220 = vcmask 523264
  %v222 = vsel %vm220, 0.0, 0
  %224 = vmatprep.subr.mxu0 %v189
  %225 = vmatpush1.msra.mxu0 %v188
  %226 = vmatprep.subr.mxu0 %v191
  %227 = vmatpush1.msra.mxu0 %v190
  %228 = vmatprep.subr.mxu0 %v193
  %229 = vmatpush1.msra.mxu0 %v192
  %230 = vmatprep.subr.mxu0 %v195
  %231 = vmatpush1.msra.mxu0 %v194
  %232 = vmatprep.subr.mxu0 %v197
  %233 = vmatpush1.msra.mxu0 %v196
  %234 = vmatprep.subr.mxu0 %v199
  %235 = vmatpush1.msra.mxu0 %v198
  %236 = vmatprep.subr.mxu0 %v201
  %237 = vmatpush1.msra.mxu0 %v200
  %238 = vmatprep.subr.mxu0 %v203
  %239 = vmatpush1.msra.mxu0 %v202
  %240 = vmatprep.subr.mxu0 0.0
  %241 = vmatpush1.msra.mxu0 0.0
  %242 = vmatprep.subr.mxu0 0.0
  %243 = vmatpush1.msra.mxu0 0.0
  %244 = vmatprep.subr.mxu0 0.0
  %245 = vmatpush1.msra.mxu0 0.0
  %246 = vmatprep.subr.mxu0 0.0
  %247 = vmatpush1.msra.mxu0 0.0
  %248 = vmatprep.subr.mxu0 0.0
  %249 = vmatpush1.msra.mxu0 0.0
  %250 = vmatprep.subr.mxu0 0.0
  %251 = vmatpush1.msra.mxu0 0.0
  %252 = vmatprep.subr.mxu0 0.0
  %253 = vmatpush1.msra.mxu0 0.0
  %254 = vmatprep.subr.mxu0 0.0
  %255 = vmatpush1.msra.mxu0 0.0
  %256 = vmatprep.subr.mxu0 0.0
  %257 = vmatpush1.msra.mxu0 0.0
  %258 = vmatprep.subr.mxu0 0.0
  %259 = vmatpush1.msra.mxu0 0.0
  %260 = vmatprep.subr.mxu0 0.0
  %261 = vmatpush1.msra.mxu0 0.0
  %262 = vmatprep.subr.mxu0 0.0
  %263 = vmatpush1.msra.mxu0 0.0
  %264 = vmatprep.subr.mxu0 0.0
  %265 = vmatpush1.msra.mxu0 0.0
  %266 = vmatprep.subr.mxu0 0.0
  %267 = vmatpush1.msra.mxu0 0.0
  %268 = vmatprep.subr.mxu0 0.0
  %269 = vmatpush1.msra.mxu0 0.0
  %270 = vmatprep.subr.mxu0 0.0
  %271 = vmatpush1.msra.mxu0 0.0
  %272 = vmatprep.subr.mxu0 0.0
  %273 = vmatpush1.msra.mxu0 0.0
  %274 = vmatprep.subr.mxu0 0.0
  %275 = vmatpush1.msra.mxu0 0.0
  %276 = vmatprep.subr.mxu0 0.0
  %277 = vmatpush1.msra.mxu0 0.0
  %278 = vmatprep.subr.mxu0 0.0
  %279 = vmatpush1.msra.mxu0 0.0
  %280 = vmatprep.subr.mxu0 0.0
  %281 = vmatpush1.msra.mxu0 0.0
  %282 = vmatprep.subr.mxu0 0.0
  %283 = vmatpush1.msra.mxu0 0.0
  %284 = vmatprep.subr.mxu0 0.0
  %285 = vmatpush1.msra.mxu0 0.0
  %286 = vmatprep.subr.mxu0 0.0
  %287 = vmatpush1.msra.mxu0 0.0
  %288 = vmatprep.mubr.f32.mxu0 0.0
  %289 = vmatmul.mubr.f32.gmra.mrb[0].mxu0 %v222
  %v290 = vpop.f32.mrb[0].mxu0
  %v291 = vadd.f32 0.0, %v290
  %v292 = vpop.f32.mrb[0].mxu0
  %v293 = vadd.f32 0.0, %v292
  %294 = vdwg.mxu0
  %v295 = vadd.f32 %v150, %v291
  %v296 = vtanh.pop %v295
  %v297 = vmul.f32 %v296, 0.5
  %v298 = vadd.f32 %v297, 0.5
  %v299 = vsel %vm219, %v296, %v298
  %v300 = vmul.f32 %v299, 0.0
  %302 = vrot.lane.b32.xlu0 %v299, 64
  %v303 = vpop.permute.xlu0 %302
  %v305 = vmul.f32 %v299, %v303
  %307 = vrot.lane.b32.xlu0 %v305, 32
  %v308 = vpop.permute.xlu0 %307
  %v310 = vadd.f32 %v300, %v308
  %v311 = vtanh.pop %v310
  %313 = vrot.lane.b32.xlu0 %v311, 64
  %v314 = vpop.permute.xlu0 %313
  %v316 = vmul.f32 %v299, %v314
  %318 = vrot.lane.b32.xlu0 %v316, 32
  %v319 = vpop.permute.xlu0 %318
  %vm320 = vcmask 261120
  %v321 = vsel %vm320, %v319, 0
  %323 = vmatprep.subr.mxu0 0.0
  %324 = vmatpush1.msra.mxu0 %v204
  %325 = vmatprep.subr.mxu0 0.0
  %326 = vmatpush1.msra.mxu0 %v205
  %327 = vmatprep.subr.mxu0 0.0
  %328 = vmatpush1.msra.mxu0 %v206
  %329 = vmatprep.subr.mxu0 0.0
  %330 = vmatpush1.msra.mxu0 %v207
  %331 = vmatprep.subr.mxu0 0.0
  %332 = vmatpush1.msra.mxu0 0.0
  %333 = vmatprep.subr.mxu0 0.0
  %334 = vmatpush1.msra.mxu0 0.0
  %335 = vmatprep.subr.mxu0 0.0
  %336 = vmatpush1.msra.mxu0 0.0
  %337 = vmatprep.subr.mxu0 0.0
  %338 = vmatpush1.msra.mxu0 0.0
  %339 = vmatprep.subr.mxu0 0.0
  %340 = vmatpush1.msra.mxu0 0.0
  %341 = vmatprep.subr.mxu0 0.0
  %342 = vmatpush1.msra.mxu0 0.0
  %343 = vmatprep.subr.mxu0 0.0
  %344 = vmatpush1.msra.mxu0 0.0
  %345 = vmatprep.subr.mxu0 0.0
  %346 = vmatpush1.msra.mxu0 0.0
  %347 = vmatprep.subr.mxu0 0.0
  %348 = vmatpush1.msra.mxu0 0.0
  %349 = vmatprep.subr.mxu0 0.0
  %350 = vmatpush1.msra.mxu0 0.0
  %351 = vmatprep.subr.mxu0 0.0
  %352 = vmatpush1.msra.mxu0 0.0
  %353 = vmatprep.subr.mxu0 0.0
  %354 = vmatpush1.msra.mxu0 0.0
  %355 = vmatprep.subr.mxu0 0.0
  %356 = vmatpush1.msra.mxu0 0.0
  %357 = vmatprep.subr.mxu0 0.0
  %358 = vmatpush1.msra.mxu0 0.0
  %359 = vmatprep.subr.mxu0 0.0
  %360 = vmatpush1.msra.mxu0 0.0
  %361 = vmatprep.subr.mxu0 0.0
  %362 = vmatpush1.msra.mxu0 0.0
  %363 = vmatprep.subr.mxu0 0.0
  %364 = vmatpush1.msra.mxu0 0.0
  %365 = vmatprep.subr.mxu0 0.0
  %366 = vmatpush1.msra.mxu0 0.0
  %367 = vmatprep.subr.mxu0 0.0
  %368 = vmatpush1.msra.mxu0 0.0
  %369 = vmatprep.subr.mxu0 0.0
  %370 = vmatpush1.msra.mxu0 0.0
  %371 = vmatprep.subr.mxu0 0.0
  %372 = vmatpush1.msra.mxu0 0.0
  %373 = vmatprep.subr.mxu0 0.0
  %374 = vmatpush1.msra.mxu0 0.0
  %375 = vmatprep.subr.mxu0 0.0
  %376 = vmatpush1.msra.mxu0 0.0
  %377 = vmatprep.subr.mxu0 0.0
  %378 = vmatpush1.msra.mxu0 0.0
  %379 = vmatprep.subr.mxu0 0.0
  %380 = vmatpush1.msra.mxu0 0.0
  %381 = vmatprep.subr.mxu0 0.0
  %382 = vmatpush1.msra.mxu0 0.0
  %383 = vmatprep.subr.mxu0 0.0
  %384 = vmatpush1.msra.mxu0 0.0
  %385 = vmatprep.subr.mxu0 0.0
  %386 = vmatpush1.msra.mxu0 0.0
  %387 = vmatprep.mubr.f32.mxu0 0.0
  %388 = vmatmul.mubr.f32.gmra.mrb[0].mxu0 %v321
  %v389 = vpop.f32.mrb[0].mxu0
  %v390 = vadd.f32 %v293, %v389
  %v391 = vpop.f32.mrb[0].mxu0
  %392 = vdwg.mxu0
  %v393 = vadd.f32 %v390, %v213
  %v394 = vtanh.pop %v393
  %v395 = vmul.f32 %v394, 0.5
  %v396 = vadd.f32 %v395, 0.5
  %v397 = vsel %vm219, %v394, %v396
  %v398 = vmul.f32 %v397, 0.0
  %400 = vrot.lane.b32.xlu0 %v397, 64
  %v401 = vpop.permute.xlu0 %400
  %v403 = vmul.f32 %v397, %v401
  %405 = vrot.lane.b32.xlu0 %v403, 32
  %v406 = vpop.permute.xlu0 %405
  %v408 = vadd.f32 %v398, %v406
  %v409 = vtanh.pop %v408
  %411 = vrot.lane.b32.xlu0 %v409, 64
  %v412 = vpop.permute.xlu0 %411
  %v414 = vmul.f32 %v397, %v412
  %417 = vrot.lane.b32.xlu0 %v414, 64
  %v418 = vpop.permute.xlu0 %417
  %v420 = vsel %vm320, %v319, %v418
  %v422 = vsel %vm220, %v420, 0
  %424 = vmatprep.subr.mxu0 %v189
  %425 = vmatpush1.msra.mxu0 %v188
  %426 = vmatprep.subr.mxu0 %v191
  %427 = vmatpush1.msra.mxu0 %v190
  %428 = vmatprep.subr.mxu0 %v193
  %429 = vmatpush1.msra.mxu0 %v192
  %430 = vmatprep.subr.mxu0 %v195
  %431 = vmatpush1.msra.mxu0 %v194
  %432 = vmatprep.subr.mxu0 %v197
  %433 = vmatpush1.msra.mxu0 %v196
  %434 = vmatprep.subr.mxu0 %v199
  %435 = vmatpush1.msra.mxu0 %v198
  %436 = vmatprep.subr.mxu0 %v201
  %437 = vmatpush1.msra.mxu0 %v200
  %438 = vmatprep.subr.mxu0 %v203
  %439 = vmatpush1.msra.mxu0 %v202
  %440 = vmatprep.subr.mxu0 0.0
  %441 = vmatpush1.msra.mxu0 0.0
  %442 = vmatprep.subr.mxu0 0.0
  %443 = vmatpush1.msra.mxu0 0.0
  %444 = vmatprep.subr.mxu0 0.0
  %445 = vmatpush1.msra.mxu0 0.0
  %446 = vmatprep.subr.mxu0 0.0
  %447 = vmatpush1.msra.mxu0 0.0
  %448 = vmatprep.subr.mxu0 0.0
  %449 = vmatpush1.msra.mxu0 0.0
  %450 = vmatprep.subr.mxu0 0.0
  %451 = vmatpush1.msra.mxu0 0.0
  %452 = vmatprep.subr.mxu0 0.0
  %453 = vmatpush1.msra.mxu0 0.0
  %454 = vmatprep.subr.mxu0 0.0
  %455 = vmatpush1.msra.mxu0 0.0
  %456 = vmatprep.subr.mxu0 0.0
  %457 = vmatpush1.msra.mxu0 0.0
  %458 = vmatprep.subr.mxu0 0.0
  %459 = vmatpush1.msra.mxu0 0.0
  %460 = vmatprep.subr.mxu0 0.0
  %461 = vmatpush1.msra.mxu0 0.0
  %462 = vmatprep.subr.mxu0 0.0
  %463 = vmatpush1.msra.mxu0 0.0
  %464 = vmatprep.subr.mxu0 0.0
  %465 = vmatpush1.msra.mxu0 0.0
  %466 = vmatprep.subr.mxu0 0.0
  %467 = vmatpush1.msra.mxu0 0.0
  %468 = vmatprep.subr.mxu0 0.0
  %469 = vmatpush1.msra.mxu0 0.0
  %470 = vmatprep.subr.mxu0 0.0
  %471 = vmatpush1.msra.mxu0 0.0
  %472 = vmatprep.subr.mxu0 0.0
  %473 = vmatpush1.msra.mxu0 0.0
  %474 = vmatprep.subr.mxu0 0.0
  %475 = vmatpush1.msra.mxu0 0.0
  %476 = vmatprep.subr.mxu0 0.0
  %477 = vmatpush1.msra.mxu0 0.0
  %478 = vmatprep.subr.mxu0 0.0
  %479 = vmatpush1.msra.mxu0 0.0
  %480 = vmatprep.subr.mxu0 0.0
  %481 = vmatpush1.msra.mxu0 0.0
  %482 = vmatprep.subr.mxu0 0.0
  %483 = vmatpush1.msra.mxu0 0.0
  %484 = vmatprep.subr.mxu0 0.0
  %485 = vmatpush1.msra.mxu0 0.0
  %486 = vmatprep.subr.mxu0 0.0
  %487 = vmatpush1.msra.mxu0 0.0
  %488 = vmatprep.mubr.f32.mxu0 0.0
  %489 = vmatmul.mubr.f32.gmra.mrb[0].mxu0 %v422
  %v490 = vpop.f32.mrb[0].mxu0
  %v491 = vadd.f32 0.0, %v490
  %v492 = vpop.f32.mrb[0].mxu0
  %v493 = vadd.f32 0.0, %v492
  %494 = vdwg.mxu0
  %v495 = vadd.f32 %v155, %v491
  %v496 = vtanh.pop %v495
  %v497 = vmul.f32 %v496, 0.5
  %v498 = vadd.f32 %v497, 0.5
  %v499 = vsel %vm219, %v496, %v498
  %v500 = vmul.f32 %v499, %v310
  %502 = vrot.lane.b32.xlu0 %v499, 64
  %v503 = vpop.permute.xlu0 %502
  %v505 = vmul.f32 %v499, %v503
  %507 = vrot.lane.b32.xlu0 %v505, 32
  %v508 = vpop.permute.xlu0 %507
  %v510 = vadd.f32 %v500, %v508
  %v511 = vtanh.pop %v510
  %513 = vrot.lane.b32.xlu0 %v511, 64
  %v514 = vpop.permute.xlu0 %513
  %v516 = vmul.f32 %v499, %v514
  %518 = vrot.lane.b32.xlu0 %v516, 32
  %v519 = vpop.permute.xlu0 %518
  %v520 = vsel %vm320, %v519, 0
  %522 = vmatprep.subr.mxu0 0.0
  %523 = vmatpush1.msra.mxu0 %v204
  %524 = vmatprep.subr.mxu0 0.0
  %525 = vmatpush1.msra.mxu0 %v205
  %526 = vmatprep.subr.mxu0 0.0
  %527 = vmatpush1.msra.mxu0 %v206
  %528 = vmatprep.subr.mxu0 0.0
  %529 = vmatpush1.msra.mxu0 %v207
  %530 = vmatprep.subr.mxu0 0.0
  %531 = vmatpush1.msra.mxu0 0.0
  %532 = vmatprep.subr.mxu0 0.0
  %533 = vmatpush1.msra.mxu0 0.0
  %534 = vmatprep.subr.mxu0 0.0
  %535 = vmatpush1.msra.mxu0 0.0
  %536 = vmatprep.subr.mxu0 0.0
  %537 = vmatpush1.msra.mxu0 0.0
  %538 = vmatprep.subr.mxu0 0.0
  %539 = vmatpush1.msra.mxu0 0.0
  %540 = vmatprep.subr.mxu0 0.0
  %541 = vmatpush1.msra.mxu0 0.0
  %542 = vmatprep.subr.mxu0 0.0
  %543 = vmatpush1.msra.mxu0 0.0
  %544 = vmatprep.subr.mxu0 0.0
  %545 = vmatpush1.msra.mxu0 0.0
  %546 = vmatprep.subr.mxu0 0.0
  %547 = vmatpush1.msra.mxu0 0.0
  %548 = vmatprep.subr.mxu0 0.0
  %549 = vmatpush1.msra.mxu0 0.0
  %550 = vmatprep.subr.mxu0 0.0
  %551 = vmatpush1.msra.mxu0 0.0
  %552 = vmatprep.subr.mxu0 0.0
  %553 = vmatpush1.msra.mxu0 0.0
  %554 = vmatprep.subr.mxu0 0.0
  %555 = vmatpush1.msra.mxu0 0.0
  %556 = vmatprep.subr.mxu0 0.0
  %557 = vmatpush1.msra.mxu0 0.0
  %558 = vmatprep.subr.mxu0 0.0
  %559 = vmatpush1.msra.mxu0 0.0
  %560 = vmatprep.subr.mxu0 0.0
  %561 = vmatpush1.msra.mxu0 0.0
  %562 = vmatprep.subr.mxu0 0.0
  %563 = vmatpush1.msra.mxu0 0.0
  %564 = vmatprep.subr.mxu0 0.0
  %565 = vmatpush1.msra.mxu0 0.0
  %566 = vmatprep.subr.mxu0 0.0
  %567 = vmatpush1.msra.mxu0 0.0
  %568 = vmatprep.subr.mxu0 0.0
  %569 = vmatpush1.msra.mxu0 0.0
  %570 = vmatprep.subr.mxu0 0.0
  %571 = vmatpush1.msra.mxu0 0.0
  %572 = vmatprep.subr.mxu0 0.0
  %573 = vmatpush1.msra.mxu0 0.0
  %574 = vmatprep.subr.mxu0 0.0
  %575 = vmatpush1.msra.mxu0 0.0
  %576 = vmatprep.subr.mxu0 0.0
  %577 = vmatpush1.msra.mxu0 0.0
  %578 = vmatprep.subr.mxu0 0.0
  %579 = vmatpush1.msra.mxu0 0.0
  %580 = vmatprep.subr.mxu0 0.0
  %581 = vmatpush1.msra.mxu0 0.0
  %582 = vmatprep.subr.mxu0 0.0
  %583 = vmatpush1.msra.mxu0 0.0
  %584 = vmatprep.subr.mxu0 0.0
  %585 = vmatpush1.msra.mxu0 0.0
  %586 = vmatprep.mubr.f32.mxu0 0.0
  %587 = vmatmul.mubr.f32.gmra.mrb[0].mxu0 %v520
  %v588 = vpop.f32.mrb[0].mxu0
  %v589 = vadd.f32 %v493, %v588
  %v590 = vpop.f32.mrb[0].mxu0
  %591 = vdwg.mxu0
  %v592 = vadd.f32 %v589, %v213
  %v593 = vtanh.pop %v592
  %v594 = vmul.f32 %v593, 0.5
  %v595 = vadd.f32 %v594, 0.5
  %v596 = vsel %vm219, %v593, %v595
  %v597 = vmul.f32 %v596, %v408
  %599 = vrot.lane.b32.xlu0 %v596, 64
  %v600 = vpop.permute.xlu0 %599
  %v602 = vmul.f32 %v596, %v600
  %604 = vrot.lane.b32.xlu0 %v602, 32
  %v605 = vpop.permute.xlu0 %604
  %v607 = vadd.f32 %v597, %v605
  %v608 = vtanh.pop %v607
  %610 = vrot.lane.b32.xlu0 %v608, 64
  %v611 = vpop.permute.xlu0 %610
  %v613 = vmul.f32 %v596, %v611
  %616 = vrot.lane.b32.xlu0 %v613, 64
  %v617 = vpop.permute.xlu0 %616
  %v619 = vsel %vm320, %v519, %v617
  %v621 = vsel %vm220, %v619, 0
  %623 = vmatprep.subr.mxu0 %v189
  %624 = vmatpush1.msra.mxu0 %v188
  %625 = vmatprep.subr.mxu0 %v191
  %626 = vmatpush1.msra.mxu0 %v190
  %627 = vmatprep.subr.mxu0 %v193
  %628 = vmatpush1.msra.mxu0 %v192
  %629 = vmatprep.subr.mxu0 %v195
  %630 = vmatpush1.msra.mxu0 %v194
  %631 = vmatprep.subr.mxu0 %v197
  %632 = vmatpush1.msra.mxu0 %v196
  %633 = vmatprep.subr.mxu0 %v199
  %634 = vmatpush1.msra.mxu0 %v198
  %635 = vmatprep.subr.mxu0 %v201
  %636 = vmatpush1.msra.mxu0 %v200
  %637 = vmatprep.subr.mxu0 %v203
  %638 = vmatpush1.msra.mxu0 %v202
  %639 = vmatprep.subr.mxu0 0.0
  %640 = vmatpush1.msra.mxu0 0.0
  %641 = vmatprep.subr.mxu0 0.0
  %642 = vmatpush1.msra.mxu0 0.0
  %643 = vmatprep.subr.mxu0 0.0
  %644 = vmatpush1.msra.mxu0 0.0
  %645 = vmatprep.subr.mxu0 0.0
  %646 = vmatpush1.msra.mxu0 0.0
  %647 = vmatprep.subr.mxu0 0.0
  %648 = vmatpush1.msra.mxu0 0.0
  %649 = vmatprep.subr.mxu0 0.0
  %650 = vmatpush1.msra.mxu0 0.0
  %651 = vmatprep.subr.mxu0 0.0
  %652 = vmatpush1.msra.mxu0 0.0
  %653 = vmatprep.subr.mxu0 0.0
  %654 = vmatpush1.msra.mxu0 0.0
  %655 = vmatprep.subr.mxu0 0.0
  %656 = vmatpush1.msra.mxu0 0.0
  %657 = vmatprep.subr.mxu0 0.0
  %658 = vmatpush1.msra.mxu0 0.0
  %659 = vmatprep.subr.mxu0 0.0
  %660 = vmatpush1.msra.mxu0 0.0
  %661 = vmatprep.subr.mxu0 0.0
  %662 = vmatpush1.msra.mxu0 0.0
  %663 = vmatprep.subr.mxu0 0.0
  %664 = vmatpush1.msra.mxu0 0.0
  %665 = vmatprep.subr.mxu0 0.0
  %666 = vmatpush1.msra.mxu0 0.0
  %667 = vmatprep.subr.mxu0 0.0
  %668 = vmatpush1.msra.mxu0 0.0
  %669 = vmatprep.subr.mxu0 0.0
  %670 = vmatpush1.msra.mxu0 0.0
  %671 = vmatprep.subr.mxu0 0.0
  %672 = vmatpush1.msra.mxu0 0.0
  %673 = vmatprep.subr.mxu0 0.0
  %674 = vmatpush1.msra.mxu0 0.0
  %675 = vmatprep.subr.mxu0 0.0
  %676 = vmatpush1.msra.mxu0 0.0
  %677 = vmatprep.subr.mxu0 0.0
  %678 = vmatpush1.msra.mxu0 0.0
  %679 = vmatprep.subr.mxu0 0.0
  %680 = vmatpush1.msra.mxu0 0.0
  %681 = vmatprep.subr.mxu0 0.0
  %682 = vmatpush1.msra.mxu0 0.0
  %683 = vmatprep.subr.mxu0 0.0
  %684 = vmatpush1.msra.mxu0 0.0
  %685 = vmatprep.subr.mxu0 0.0
  %686 = vmatpush1.msra.mxu0 0.0
  %687 = vmatprep.mubr.f32.mxu0 0.0
  %688 = vmatmul.mubr.f32.gmra.mrb[0].mxu0 %v621
  %v689 = vpop.f32.mrb[0].mxu0
  %v690 = vadd.f32 0.0, %v689
  %v691 = vpop.f32.mrb[0].mxu0
  %v692 = vadd.f32 0.0, %v691
  %693 = vdwg.mxu0
  %v694 = vadd.f32 %v160, %v690
  %v695 = vtanh.pop %v694
  %v696 = vmul.f32 %v695, 0.5
  %v697 = vadd.f32 %v696, 0.5
  %v698 = vsel %vm219, %v695, %v697
  %v699 = vmul.f32 %v698, %v510
  %701 = vrot.lane.b32.xlu0 %v698, 64
  %v702 = vpop.permute.xlu0 %701
  %v704 = vmul.f32 %v698, %v702
  %706 = vrot.lane.b32.xlu0 %v704, 32
  %v707 = vpop.permute.xlu0 %706
  %v709 = vadd.f32 %v699, %v707
  %v710 = vtanh.pop %v709
  %712 = vrot.lane.b32.xlu0 %v710, 64
  %v713 = vpop.permute.xlu0 %712
  %v715 = vmul.f32 %v698, %v713
  %717 = vrot.lane.b32.xlu0 %v715, 32
  %v718 = vpop.permute.xlu0 %717
  %v719 = vsel %vm320, %v718, 0
  %721 = vmatprep.subr.mxu0 0.0
  %722 = vmatpush1.msra.mxu0 %v204
  %723 = vmatprep.subr.mxu0 0.0
  %724 = vmatpush1.msra.mxu0 %v205
  %725 = vmatprep.subr.mxu0 0.0
  %726 = vmatpush1.msra.mxu0 %v206
  %727 = vmatprep.subr.mxu0 0.0
  %728 = vmatpush1.msra.mxu0 %v207
  %729 = vmatprep.subr.mxu0 0.0
  %730 = vmatpush1.msra.mxu0 0.0
  %731 = vmatprep.subr.mxu0 0.0
  %732 = vmatpush1.msra.mxu0 0.0
  %733 = vmatprep.subr.mxu0 0.0
  %734 = vmatpush1.msra.mxu0 0.0
  %735 = vmatprep.subr.mxu0 0.0
  %736 = vmatpush1.msra.mxu0 0.0
  %737 = vmatprep.subr.mxu0 0.0
  %738 = vmatpush1.msra.mxu0 0.0
  %739 = vmatprep.subr.mxu0 0.0
  %740 = vmatpush1.msra.mxu0 0.0
  %741 = vmatprep.subr.mxu0 0.0
  %742 = vmatpush1.msra.mxu0 0.0
  %743 = vmatprep.subr.mxu0 0.0
  %744 = vmatpush1.msra.mxu0 0.0
  %745 = vmatprep.subr.mxu0 0.0
  %746 = vmatpush1.msra.mxu0 0.0
  %747 = vmatprep.subr.mxu0 0.0
  %748 = vmatpush1.msra.mxu0 0.0
  %749 = vmatprep.subr.mxu0 0.0
  %750 = vmatpush1.msra.mxu0 0.0
  %751 = vmatprep.subr.mxu0 0.0
  %752 = vmatpush1.msra.mxu0 0.0
  %753 = vmatprep.subr.mxu0 0.0
  %754 = vmatpush1.msra.mxu0 0.0
  %755 = vmatprep.subr.mxu0 0.0
  %756 = vmatpush1.msra.mxu0 0.0
  %757 = vmatprep.subr.mxu0 0.0
  %758 = vmatpush1.msra.mxu0 0.0
  %759 = vmatprep.subr.mxu0 0.0
  %760 = vmatpush1.msra.mxu0 0.0
  %761 = vmatprep.subr.mxu0 0.0
  %762 = vmatpush1.msra.mxu0 0.0
  %763 = vmatprep.subr.mxu0 0.0
  %764 = vmatpush1.msra.mxu0 0.0
  %765 = vmatprep.subr.mxu0 0.0
  %766 = vmatpush1.msra.mxu0 0.0
  %767 = vmatprep.subr.mxu0 0.0
  %768 = vmatpush1.msra.mxu0 0.0
  %769 = vmatprep.subr.mxu0 0.0
  %770 = vmatpush1.msra.mxu0 0.0
  %771 = vmatprep.subr.mxu0 0.0
  %772 = vmatpush1.msra.mxu0 0.0
  %773 = vmatprep.subr.mxu0 0.0
  %774 = vmatpush1.msra.mxu0 0.0
  %775 = vmatprep.subr.mxu0 0.0
  %776 = vmatpush1.msra.mxu0 0.0
  %777 = vmatprep.subr.mxu0 0.0
  %778 = vmatpush1.msra.mxu0 0.0
  %779 = vmatprep.subr.mxu0 0.0
  %780 = vmatpush1.msra.mxu0 0.0
  %781 = vmatprep.subr.mxu0 0.0
  %782 = vmatpush1.msra.mxu0 0.0
  %783 = vmatprep.subr.mxu0 0.0
  %784 = vmatpush1.msra.mxu0 0.0
  %785 = vmatprep.mubr.f32.mxu0 0.0
  %786 = vmatmul.mubr.f32.gmra.mrb[0].mxu0 %v719
  %v787 = vpop.f32.mrb[0].mxu0
  %v788 = vadd.f32 %v692, %v787
  %v789 = vpop.f32.mrb[0].mxu0
  %790 = vdwg.mxu0
  %v791 = vadd.f32 %v788, %v213
  %v792 = vtanh.pop %v791
  %v793 = vmul.f32 %v792, 0.5
  %v794 = vadd.f32 %v793, 0.5
  %v795 = vsel %vm219, %v792, %v794
  %v796 = vmul.f32 %v795, %v607
  %798 = vrot.lane.b32.xlu0 %v795, 64
  %v799 = vpop.permute.xlu0 %798
  %v801 = vmul.f32 %v795, %v799
  %803 = vrot.lane.b32.xlu0 %v801, 32
  %v804 = vpop.permute.xlu0 %803
  %v806 = vadd.f32 %v796, %v804
  %v807 = vtanh.pop %v806
  %809 = vrot.lane.b32.xlu0 %v807, 64
  %v810 = vpop.permute.xlu0 %809
  %v812 = vmul.f32 %v795, %v810
  %815 = vrot.lane.b32.xlu0 %v812, 64
  %v816 = vpop.permute.xlu0 %815
  %v818 = vsel %vm320, %v718, %v816
  %v820 = vsel %vm220, %v818, 0
  %822 = vmatprep.subr.mxu0 %v189
  %823 = vmatpush1.msra.mxu0 %v188
  %824 = vmatprep.subr.mxu0 %v191
  %825 = vmatpush1.msra.mxu0 %v190
  %826 = vmatprep.subr.mxu0 %v193
  %827 = vmatpush1.msra.mxu0 %v192
  %828 = vmatprep.subr.mxu0 %v195
  %829 = vmatpush1.msra.mxu0 %v194
  %830 = vmatprep.subr.mxu0 %v197
  %831 = vmatpush1.msra.mxu0 %v196
  %832 = vmatprep.subr.mxu0 %v199
  %833 = vmatpush1.msra.mxu0 %v198
  %834 = vmatprep.subr.mxu0 %v201
  %835 = vmatpush1.msra.mxu0 %v200
  %836 = vmatprep.subr.mxu0 %v203
  %837 = vmatpush1.msra.mxu0 %v202
  %838 = vmatprep.subr.mxu0 0.0
  %839 = vmatpush1.msra.mxu0 0.0
  %840 = vmatprep.subr.mxu0 0.0
  %841 = vmatpush1.msra.mxu0 0.0
  %842 = vmatprep.subr.mxu0 0.0
  %843 = vmatpush1.msra.mxu0 0.0
  %844 = vmatprep.subr.mxu0 0.0
  %845 = vmatpush1.msra.mxu0 0.0
  %846 = vmatprep.subr.mxu0 0.0
  %847 = vmatpush1.msra.mxu0 0.0
  %848 = vmatprep.subr.mxu0 0.0
  %849 = vmatpush1.msra.mxu0 0.0
  %850 = vmatprep.subr.mxu0 0.0
  %851 = vmatpush1.msra.mxu0 0.0
  %852 = vmatprep.subr.mxu0 0.0
  %853 = vmatpush1.msra.mxu0 0.0
  %854 = vmatprep.subr.mxu0 0.0
  %855 = vmatpush1.msra.mxu0 0.0
  %856 = vmatprep.subr.mxu0 0.0
  %857 = vmatpush1.msra.mxu0 0.0
  %858 = vmatprep.subr.mxu0 0.0
  %859 = vmatpush1.msra.mxu0 0.0
  %860 = vmatprep.subr.mxu0 0.0
  %861 = vmatpush1.msra.mxu0 0.0
  %862 = vmatprep.subr.mxu0 0.0
  %863 = vmatpush1.msra.mxu0 0.0
  %864 = vmatprep.subr.mxu0 0.0
  %865 = vmatpush1.msra.mxu0 0.0
  %866 = vmatprep.subr.mxu0 0.0
  %867 = vmatpush1.msra.mxu0 0.0
  %868 = vmatprep.subr.mxu0 0.0
  %869 = vmatpush1.msra.mxu0 0.0
  %870 = vmatprep.subr.mxu0 0.0
  %871 = vmatpush1.msra.mxu0 0.0
  %872 = vmatprep.subr.mxu0 0.0
  %873 = vmatpush1.msra.mxu0 0.0
  %874 = vmatprep.subr.mxu0 0.0
  %875 = vmatpush1.msra.mxu0 0.0
  %876 = vmatprep.subr.mxu0 0.0
  %877 = vmatpush1.msra.mxu0 0.0
  %878 = vmatprep.subr.mxu0 0.0
  %879 = vmatpush1.msra.mxu0 0.0
  %880 = vmatprep.subr.mxu0 0.0
  %881 = vmatpush1.msra.mxu0 0.0
  %882 = vmatprep.subr.mxu0 0.0
  %883 = vmatpush1.msra.mxu0 0.0
  %884 = vmatprep.subr.mxu0 0.0
  %885 = vmatpush1.msra.mxu0 0.0
  %886 = vmatprep.mubr.f32.mxu0 0.0
  %887 = vmatmul.mubr.f32.gmra.mrb[0].mxu0 %v820
  %v888 = vpop.f32.mrb[0].mxu0
  %v889 = vadd.f32 0.0, %v888
  %v890 = vpop.f32.mrb[0].mxu0
  %v891 = vadd.f32 0.0, %v890
  %892 = vdwg.mxu0
  %v893 = vadd.f32 %v165, %v889
  %v894 = vtanh.pop %v893
  %v895 = vmul.f32 %v894, 0.5
  %v896 = vadd.f32 %v895, 0.5
  %v897 = vsel %vm219, %v894, %v896
  %v898 = vmul.f32 %v897, %v709
  %900 = vrot.lane.b32.xlu0 %v897, 64
  %v901 = vpop.permute.xlu0 %900
  %v903 = vmul.f32 %v897, %v901
  %905 = vrot.lane.b32.xlu0 %v903, 32
  %v906 = vpop.permute.xlu0 %905
  %v908 = vadd.f32 %v898, %v906
  %v909 = vtanh.pop %v908
  %911 = vrot.lane.b32.xlu0 %v909, 64
  %v912 = vpop.permute.xlu0 %911
  %v914 = vmul.f32 %v897, %v912
  %916 = vrot.lane.b32.xlu0 %v914, 32
  %v917 = vpop.permute.xlu0 %916
  %v918 = vsel %vm320, %v917, 0
  %920 = vmatprep.subr.mxu0 0.0
  %921 = vmatpush1.msra.mxu0 %v204
  %922 = vmatprep.subr.mxu0 0.0
  %923 = vmatpush1.msra.mxu0 %v205
  %924 = vmatprep.subr.mxu0 0.0
  %925 = vmatpush1.msra.mxu0 %v206
  %926 = vmatprep.subr.mxu0 0.0
  %927 = vmatpush1.msra.mxu0 %v207
  %928 = vmatprep.subr.mxu0 0.0
  %929 = vmatpush1.msra.mxu0 0.0
  %930 = vmatprep.subr.mxu0 0.0
  %931 = vmatpush1.msra.mxu0 0.0
  %932 = vmatprep.subr.mxu0 0.0
  %933 = vmatpush1.msra.mxu0 0.0
  %934 = vmatprep.subr.mxu0 0.0
  %935 = vmatpush1.msra.mxu0 0.0
  %936 = vmatprep.subr.mxu0 0.0
  %937 = vmatpush1.msra.mxu0 0.0
  %938 = vmatprep.subr.mxu0 0.0
  %939 = vmatpush1.msra.mxu0 0.0
  %940 = vmatprep.subr.mxu0 0.0
  %941 = vmatpush1.msra.mxu0 0.0
  %942 = vmatprep.subr.mxu0 0.0
  %943 = vmatpush1.msra.mxu0 0.0
  %944 = vmatprep.subr.mxu0 0.0
  %945 = vmatpush1.msra.mxu0 0.0
  %946 = vmatprep.subr.mxu0 0.0
  %947 = vmatpush1.msra.mxu0 0.0
  %948 = vmatprep.subr.mxu0 0.0
  %949 = vmatpush1.msra.mxu0 0.0
  %950 = vmatprep.subr.mxu0 0.0
  %951 = vmatpush1.msra.mxu0 0.0
  %952 = vmatprep.subr.mxu0 0.0
  %953 = vmatpush1.msra.mxu0 0.0
  %954 = vmatprep.subr.mxu0 0.0
  %955 = vmatpush1.msra.mxu0 0.0
  %956 = vmatprep.subr.mxu0 0.0
  %957 = vmatpush1.msra.mxu0 0.0
  %958 = vmatprep.subr.mxu0 0.0
  %959 = vmatpush1.msra.mxu0 0.0
  %960 = vmatprep.subr.mxu0 0.0
  %961 = vmatpush1.msra.mxu0 0.0
  %962 = vmatprep.subr.mxu0 0.0
  %963 = vmatpush1.msra.mxu0 0.0
  %964 = vmatprep.subr.mxu0 0.0
  %965 = vmatpush1.msra.mxu0 0.0
  %966 = vmatprep.subr.mxu0 0.0
  %967 = vmatpush1.msra.mxu0 0.0
  %968 = vmatprep.subr.mxu0 0.0
  %969 = vmatpush1.msra.mxu0 0.0
  %970 = vmatprep.subr.mxu0 0.0
  %971 = vmatpush1.msra.mxu0 0.0
  %972 = vmatprep.subr.mxu0 0.0
  %973 = vmatpush1.msra.mxu0 0.0
  %974 = vmatprep.subr.mxu0 0.0
  %975 = vmatpush1.msra.mxu0 0.0
  %976 = vmatprep.subr.mxu0 0.0
  %977 = vmatpush1.msra.mxu0 0.0
  %978 = vmatprep.subr.mxu0 0.0
  %979 = vmatpush1.msra.mxu0 0.0
  %980 = vmatprep.subr.mxu0 0.0
  %981 = vmatpush1.msra.mxu0 0.0
  %982 = vmatprep.subr.mxu0 0.0
  %983 = vmatpush1.msra.mxu0 0.0
  %984 = vmatprep.mubr.f32.mxu0 0.0
  %985 = vmatmul.mubr.f32.gmra.mrb[0].mxu0 %v918
  %v986 = vpop.f32.mrb[0].mxu0
  %v987 = vadd.f32 %v891, %v986
  %v988 = vpop.f32.mrb[0].mxu0
  %989 = vdwg.mxu0
  %v990 = vadd.f32 %v987, %v213
  %v991 = vtanh.pop %v990
  %v992 = vmul.f32 %v991, 0.5
  %v993 = vadd.f32 %v992, 0.5
  %v994 = vsel %vm219, %v991, %v993
  %v995 = vmul.f32 %v994, %v806
  %997 = vrot.lane.b32.xlu0 %v994, 64
  %v998 = vpop.permute.xlu0 %997
  %v1000 = vmul.f32 %v994, %v998
  %1002 = vrot.lane.b32.xlu0 %v1000, 32
  %v1003 = vpop.permute.xlu0 %1002
  %v1005 = vadd.f32 %v995, %v1003
  %v1006 = vtanh.pop %v1005
  %1008 = vrot.lane.b32.xlu0 %v1006, 64
  %v1009 = vpop.permute.xlu0 %1008
  %v1011 = vmul.f32 %v994, %v1009
  %1014 = vrot.lane.b32.xlu0 %v1011, 64
  %v1015 = vpop.permute.xlu0 %1014
  %v1017 = vsel %vm320, %v917, %v1015
  %v1019 = vsel %vm220, %v1017, 0
  %1021 = vmatprep.subr.mxu0 %v189
  %1022 = vmatpush1.msra.mxu0 %v188
  %1023 = vmatprep.subr.mxu0 %v191
  %1024 = vmatpush1.msra.mxu0 %v190
  %1025 = vmatprep.subr.mxu0 %v193
  %1026 = vmatpush1.msra.mxu0 %v192
  %1027 = vmatprep.subr.mxu0 %v195
  %1028 = vmatpush1.msra.mxu0 %v194
  %1029 = vmatprep.subr.mxu0 %v197
  %1030 = vmatpush1.msra.mxu0 %v196
  %1031 = vmatprep.subr.mxu0 %v199
  %1032 = vmatpush1.msra.mxu0 %v198
  %1033 = vmatprep.subr.mxu0 %v201
  %1034 = vmatpush1.msra.mxu0 %v200
  %1035 = vmatprep.subr.mxu0 %v203
  %1036 = vmatpush1.msra.mxu0 %v202
  %1037 = vmatprep.subr.mxu0 0.0
  %1038 = vmatpush1.msra.mxu0 0.0
  %1039 = vmatprep.subr.mxu0 0.0
  %1040 = vmatpush1.msra.mxu0 0.0
  %1041 = vmatprep.subr.mxu0 0.0
  %1042 = vmatpush1.msra.mxu0 0.0
  %1043 = vmatprep.subr.mxu0 0.0
  %1044 = vmatpush1.msra.mxu0 0.0
  %1045 = vmatprep.subr.mxu0 0.0
  %1046 = vmatpush1.msra.mxu0 0.0
  %1047 = vmatprep.subr.mxu0 0.0
  %1048 = vmatpush1.msra.mxu0 0.0
  %1049 = vmatprep.subr.mxu0 0.0
  %1050 = vmatpush1.msra.mxu0 0.0
  %1051 = vmatprep.subr.mxu0 0.0
  %1052 = vmatpush1.msra.mxu0 0.0
  %1053 = vmatprep.subr.mxu0 0.0
  %1054 = vmatpush1.msra.mxu0 0.0
  %1055 = vmatprep.subr.mxu0 0.0
  %1056 = vmatpush1.msra.mxu0 0.0
  %1057 = vmatprep.subr.mxu0 0.0
  %1058 = vmatpush1.msra.mxu0 0.0
  %1059 = vmatprep.subr.mxu0 0.0
  %1060 = vmatpush1.msra.mxu0 0.0
  %1061 = vmatprep.subr.mxu0 0.0
  %1062 = vmatpush1.msra.mxu0 0.0
  %1063 = vmatprep.subr.mxu0 0.0
  %1064 = vmatpush1.msra.mxu0 0.0
  %1065 = vmatprep.subr.mxu0 0.0
  %1066 = vmatpush1.msra.mxu0 0.0
  %1067 = vmatprep.subr.mxu0 0.0
  %1068 = vmatpush1.msra.mxu0 0.0
  %1069 = vmatprep.subr.mxu0 0.0
  %1070 = vmatpush1.msra.mxu0 0.0
  %1071 = vmatprep.subr.mxu0 0.0
  %1072 = vmatpush1.msra.mxu0 0.0
  %1073 = vmatprep.subr.mxu0 0.0
  %1074 = vmatpush1.msra.mxu0 0.0
  %1075 = vmatprep.subr.mxu0 0.0
  %1076 = vmatpush1.msra.mxu0 0.0
  %1077 = vmatprep.subr.mxu0 0.0
  %1078 = vmatpush1.msra.mxu0 0.0
  %1079 = vmatprep.subr.mxu0 0.0
  %1080 = vmatpush1.msra.mxu0 0.0
  %1081 = vmatprep.subr.mxu0 0.0
  %1082 = vmatpush1.msra.mxu0 0.0
  %1083 = vmatprep.subr.mxu0 0.0
  %1084 = vmatpush1.msra.mxu0 0.0
  %1085 = vmatprep.mubr.f32.mxu0 0.0
  %1086 = vmatmul.mubr.f32.gmra.mrb[0].mxu0 %v1019
  %v1087 = vpop.f32.mrb[0].mxu0
  %v1088 = vadd.f32 0.0, %v1087
  %v1089 = vpop.f32.mrb[0].mxu0
  %v1090 = vadd.f32 0.0, %v1089
  %1091 = vdwg.mxu0
  %v1092 = vadd.f32 %v170, %v1088
  %v1093 = vtanh.pop %v1092
  %v1094 = vmul.f32 %v1093, 0.5
  %v1095 = vadd.f32 %v1094, 0.5
  %v1096 = vsel %vm219, %v1093, %v1095
  %v1097 = vmul.f32 %v1096, %v908
  %1099 = vrot.lane.b32.xlu0 %v1096, 64
  %v1100 = vpop.permute.xlu0 %1099
  %v1102 = vmul.f32 %v1096, %v1100
  %1104 = vrot.lane.b32.xlu0 %v1102, 32
  %v1105 = vpop.permute.xlu0 %1104
  %v1107 = vadd.f32 %v1097, %v1105
  %v1108 = vtanh.pop %v1107
  %1110 = vrot.lane.b32.xlu0 %v1108, 64
  %v1111 = vpop.permute.xlu0 %1110
  %v1113 = vmul.f32 %v1096, %v1111
  %1115 = vrot.lane.b32.xlu0 %v1113, 32
  %v1116 = vpop.permute.xlu0 %1115
  %v1117 = vsel %vm320, %v1116, 0
  %1119 = vmatprep.subr.mxu0 0.0
  %1120 = vmatpush1.msra.mxu0 %v204
  %1121 = vmatprep.subr.mxu0 0.0
  %1122 = vmatpush1.msra.mxu0 %v205
  %1123 = vmatprep.subr.mxu0 0.0
  %1124 = vmatpush1.msra.mxu0 %v206
  %1125 = vmatprep.subr.mxu0 0.0
  %1126 = vmatpush1.msra.mxu0 %v207
  %1127 = vmatprep.subr.mxu0 0.0
  %1128 = vmatpush1.msra.mxu0 0.0
  %1129 = vmatprep.subr.mxu0 0.0
  %1130 = vmatpush1.msra.mxu0 0.0
  %1131 = vmatprep.subr.mxu0 0.0
  %1132 = vmatpush1.msra.mxu0 0.0
  %1133 = vmatprep.subr.mxu0 0.0
  %1134 = vmatpush1.msra.mxu0 0.0
  %1135 = vmatprep.subr.mxu0 0.0
  %1136 = vmatpush1.msra.mxu0 0.0
  %1137 = vmatprep.subr.mxu0 0.0
  %1138 = vmatpush1.msra.mxu0 0.0
  %1139 = vmatprep.subr.mxu0 0.0
  %1140 = vmatpush1.msra.mxu0 0.0
  %1141 = vmatprep.subr.mxu0 0.0
  %1142 = vmatpush1.msra.mxu0 0.0
  %1143 = vmatprep.subr.mxu0 0.0
  %1144 = vmatpush1.msra.mxu0 0.0
  %1145 = vmatprep.subr.mxu0 0.0
  %1146 = vmatpush1.msra.mxu0 0.0
  %1147 = vmatprep.subr.mxu0 0.0
  %1148 = vmatpush1.msra.mxu0 0.0
  %1149 = vmatprep.subr.mxu0 0.0
  %1150 = vmatpush1.msra.mxu0 0.0
  %1151 = vmatprep.subr.mxu0 0.0
  %1152 = vmatpush1.msra.mxu0 0.0
  %1153 = vmatprep.subr.mxu0 0.0
  %1154 = vmatpush1.msra.mxu0 0.0
  %1155 = vmatprep.subr.mxu0 0.0
  %1156 = vmatpush1.msra.mxu0 0.0
  %1157 = vmatprep.subr.mxu0 0.0
  %1158 = vmatpush1.msra.mxu0 0.0
  %1159 = vmatprep.subr.mxu0 0.0
  %1160 = vmatpush1.msra.mxu0 0.0
  %1161 = vmatprep.subr.mxu0 0.0
  %1162 = vmatpush1.msra.mxu0 0.0
  %1163 = vmatprep.subr.mxu0 0.0
  %1164 = vmatpush1.msra.mxu0 0.0
  %1165 = vmatprep.subr.mxu0 0.0
  %1166 = vmatpush1.msra.mxu0 0.0
  %1167 = vmatprep.subr.mxu0 0.0
  %1168 = vmatpush1.msra.mxu0 0.0
  %1169 = vmatprep.subr.mxu0 0.0
  %1170 = vmatpush1.msra.mxu0 0.0
  %1171 = vmatprep.subr.mxu0 0.0
  %1172 = vmatpush1.msra.mxu0 0.0
  %1173 = vmatprep.subr.mxu0 0.0
  %1174 = vmatpush1.msra.mxu0 0.0
  %1175 = vmatprep.subr.mxu0 0.0
  %1176 = vmatpush1.msra.mxu0 0.0
  %1177 = vmatprep.subr.mxu0 0.0
  %1178 = vmatpush1.msra.mxu0 0.0
  %1179 = vmatprep.subr.mxu0 0.0
  %1180 = vmatpush1.msra.mxu0 0.0
  %1181 = vmatprep.subr.mxu0 0.0
  %1182 = vmatpush1.msra.mxu0 0.0
  %1183 = vmatprep.mubr.f32.mxu0 0.0
  %1184 = vmatmul.mubr.f32.gmra.mrb[0].mxu0 %v1117
  %v1185 = vpop.f32.mrb[0].mxu0
  %v1186 = vadd.f32 %v1090, %v1185
  %v1187 = vpop.f32.mrb[0].mxu0
  %1188 = vdwg.mxu0
  %v1189 = vadd.f32 %v1186, %v213
  %v1190 = vtanh.pop %v1189
  %v1191 = vmul.f32 %v1190, 0.5
  %v1192 = vadd.f32 %v1191, 0.5
  %v1193 = vsel %vm219, %v1190, %v1192
  %v1194 = vmul.f32 %v1193, %v1005
  %1196 = vrot.lane.b32.xlu0 %v1193, 64
  %v1197 = vpop.permute.xlu0 %1196
  %v1199 = vmul.f32 %v1193, %v1197
  %1201 = vrot.lane.b32.xlu0 %v1199, 32
  %v1202 = vpop.permute.xlu0 %1201
  %v1204 = vadd.f32 %v1194, %v1202
  %v1205 = vtanh.pop %v1204
  %1207 = vrot.lane.b32.xlu0 %v1205, 64
  %v1208 = vpop.permute.xlu0 %1207
  %v1210 = vmul.f32 %v1193, %v1208
  %1213 = vrot.lane.b32.xlu0 %v1210, 64
  %v1214 = vpop.permute.xlu0 %1213
  %v1216 = vsel %vm320, %v1116, %v1214
  %v1218 = vsel %vm220, %v1216, 0
  %1220 = vmatprep.subr.mxu0 %v189
  %1221 = vmatpush1.msra.mxu0 %v188
  %1222 = vmatprep.subr.mxu0 %v191
  %1223 = vmatpush1.msra.mxu0 %v190
  %1224 = vmatprep.subr.mxu0 %v193
  %1225 = vmatpush1.msra.mxu0 %v192
  %1226 = vmatprep.subr.mxu0 %v195
  %1227 = vmatpush1.msra.mxu0 %v194
  %1228 = vmatprep.subr.mxu0 %v197
  %1229 = vmatpush1.msra.mxu0 %v196
  %1230 = vmatprep.subr.mxu0 %v199
  %1231 = vmatpush1.msra.mxu0 %v198
  %1232 = vmatprep.subr.mxu0 %v201
  %1233 = vmatpush1.msra.mxu0 %v200
  %1234 = vmatprep.subr.mxu0 %v203
  %1235 = vmatpush1.msra.mxu0 %v202
  %1236 = vmatprep.subr.mxu0 0.0
  %1237 = vmatpush1.msra.mxu0 0.0
  %1238 = vmatprep.subr.mxu0 0.0
  %1239 = vmatpush1.msra.mxu0 0.0
  %1240 = vmatprep.subr.mxu0 0.0
  %1241 = vmatpush1.msra.mxu0 0.0
  %1242 = vmatprep.subr.mxu0 0.0
  %1243 = vmatpush1.msra.mxu0 0.0
  %1244 = vmatprep.subr.mxu0 0.0
  %1245 = vmatpush1.msra.mxu0 0.0
  %1246 = vmatprep.subr.mxu0 0.0
  %1247 = vmatpush1.msra.mxu0 0.0
  %1248 = vmatprep.subr.mxu0 0.0
  %1249 = vmatpush1.msra.mxu0 0.0
  %1250 = vmatprep.subr.mxu0 0.0
  %1251 = vmatpush1.msra.mxu0 0.0
  %1252 = vmatprep.subr.mxu0 0.0
  %1253 = vmatpush1.msra.mxu0 0.0
  %1254 = vmatprep.subr.mxu0 0.0
  %1255 = vmatpush1.msra.mxu0 0.0
  %1256 = vmatprep.subr.mxu0 0.0
  %1257 = vmatpush1.msra.mxu0 0.0
  %1258 = vmatprep.subr.mxu0 0.0
  %1259 = vmatpush1.msra.mxu0 0.0
  %1260 = vmatprep.subr.mxu0 0.0
  %1261 = vmatpush1.msra.mxu0 0.0
  %1262 = vmatprep.subr.mxu0 0.0
  %1263 = vmatpush1.msra.mxu0 0.0
  %1264 = vmatprep.subr.mxu0 0.0
  %1265 = vmatpush1.msra.mxu0 0.0
  %1266 = vmatprep.subr.mxu0 0.0
  %1267 = vmatpush1.msra.mxu0 0.0
  %1268 = vmatprep.subr.mxu0 0.0
  %1269 = vmatpush1.msra.mxu0 0.0
  %1270 = vmatprep.subr.mxu0 0.0
  %1271 = vmatpush1.msra.mxu0 0.0
  %1272 = vmatprep.subr.mxu0 0.0
  %1273 = vmatpush1.msra.mxu0 0.0
  %1274 = vmatprep.subr.mxu0 0.0
  %1275 = vmatpush1.msra.mxu0 0.0
  %1276 = vmatprep.subr.mxu0 0.0
  %1277 = vmatpush1.msra.mxu0 0.0
  %1278 = vmatprep.subr.mxu0 0.0
  %1279 = vmatpush1.msra.mxu0 0.0
  %1280 = vmatprep.subr.mxu0 0.0
  %1281 = vmatpush1.msra.mxu0 0.0
  %1282 = vmatprep.subr.mxu0 0.0
  %1283 = vmatpush1.msra.mxu0 0.0
  %1284 = vmatprep.mubr.f32.mxu0 0.0
  %1285 = vmatmul.mubr.f32.gmra.mrb[0].mxu0 %v1218
  %v1286 = vpop.f32.mrb[0].mxu0
  %v1287 = vadd.f32 0.0, %v1286
  %v1288 = vpop.f32.mrb[0].mxu0
  %v1289 = vadd.f32 0.0, %v1288
  %1290 = vdwg.mxu0
  %v1291 = vadd.f32 %v175, %v1287
  %v1292 = vtanh.pop %v1291
  %v1293 = vmul.f32 %v1292, 0.5
  %v1294 = vadd.f32 %v1293, 0.5
  %v1295 = vsel %vm219, %v1292, %v1294
  %v1296 = vmul.f32 %v1295, %v1107
  %1298 = vrot.lane.b32.xlu0 %v1295, 64
  %v1299 = vpop.permute.xlu0 %1298
  %v1301 = vmul.f32 %v1295, %v1299
  %1303 = vrot.lane.b32.xlu0 %v1301, 32
  %v1304 = vpop.permute.xlu0 %1303
  %v1306 = vadd.f32 %v1296, %v1304
  %v1307 = vtanh.pop %v1306
  %1309 = vrot.lane.b32.xlu0 %v1307, 64
  %v1310 = vpop.permute.xlu0 %1309
  %v1312 = vmul.f32 %v1295, %v1310
  %1314 = vrot.lane.b32.xlu0 %v1312, 32
  %v1315 = vpop.permute.xlu0 %1314
  %v1316 = vsel %vm320, %v1315, 0
  %1318 = vmatprep.subr.mxu0 0.0
  %1319 = vmatpush1.msra.mxu0 %v204
  %1320 = vmatprep.subr.mxu0 0.0
  %1321 = vmatpush1.msra.mxu0 %v205
  %1322 = vmatprep.subr.mxu0 0.0
  %1323 = vmatpush1.msra.mxu0 %v206
  %1324 = vmatprep.subr.mxu0 0.0
  %1325 = vmatpush1.msra.mxu0 %v207
  %1326 = vmatprep.subr.mxu0 0.0
  %1327 = vmatpush1.msra.mxu0 0.0
  %1328 = vmatprep.subr.mxu0 0.0
  %1329 = vmatpush1.msra.mxu0 0.0
  %1330 = vmatprep.subr.mxu0 0.0
  %1331 = vmatpush1.msra.mxu0 0.0
  %1332 = vmatprep.subr.mxu0 0.0
  %1333 = vmatpush1.msra.mxu0 0.0
  %1334 = vmatprep.subr.mxu0 0.0
  %1335 = vmatpush1.msra.mxu0 0.0
  %1336 = vmatprep.subr.mxu0 0.0
  %1337 = vmatpush1.msra.mxu0 0.0
  %1338 = vmatprep.subr.mxu0 0.0
  %1339 = vmatpush1.msra.mxu0 0.0
  %1340 = vmatprep.subr.mxu0 0.0
  %1341 = vmatpush1.msra.mxu0 0.0
  %1342 = vmatprep.subr.mxu0 0.0
  %1343 = vmatpush1.msra.mxu0 0.0
  %1344 = vmatprep.subr.mxu0 0.0
  %1345 = vmatpush1.msra.mxu0 0.0
  %1346 = vmatprep.subr.mxu0 0.0
  %1347 = vmatpush1.msra.mxu0 0.0
  %1348 = vmatprep.subr.mxu0 0.0
  %1349 = vmatpush1.msra.mxu0 0.0
  %1350 = vmatprep.subr.mxu0 0.0
  %1351 = vmatpush1.msra.mxu0 0.0
  %1352 = vmatprep.subr.mxu0 0.0
  %1353 = vmatpush1.msra.mxu0 0.0
  %1354 = vmatprep.subr.mxu0 0.0
  %1355 = vmatpush1.msra.mxu0 0.0
  %1356 = vmatprep.subr.mxu0 0.0
  %1357 = vmatpush1.msra.mxu0 0.0
  %1358 = vmatprep.subr.mxu0 0.0
  %1359 = vmatpush1.msra.mxu0 0.0
  %1360 = vmatprep.subr.mxu0 0.0
  %1361 = vmatpush1.msra.mxu0 0.0
  %1362 = vmatprep.subr.mxu0 0.0
  %1363 = vmatpush1.msra.mxu0 0.0
  %1364 = vmatprep.subr.mxu0 0.0
  %1365 = vmatpush1.msra.mxu0 0.0
  %1366 = vmatprep.subr.mxu0 0.0
  %1367 = vmatpush1.msra.mxu0 0.0
  %1368 = vmatprep.subr.mxu0 0.0
  %1369 = vmatpush1.msra.mxu0 0.0
  %1370 = vmatprep.subr.mxu0 0.0
  %1371 = vmatpush1.msra.mxu0 0.0
  %1372 = vmatprep.subr.mxu0 0.0
  %1373 = vmatpush1.msra.mxu0 0.0
  %1374 = vmatprep.subr.mxu0 0.0
  %1375 = vmatpush1.msra.mxu0 0.0
  %1376 = vmatprep.subr.mxu0 0.0
  %1377 = vmatpush1.msra.mxu0 0.0
  %1378 = vmatprep.subr.mxu0 0.0
  %1379 = vmatpush1.msra.mxu0 0.0
  %1380 = vmatprep.subr.mxu0 0.0
  %1381 = vmatpush1.msra.mxu0 0.0
  %1382 = vmatprep.mubr.f32.mxu0 0.0
  %1383 = vmatmul.mubr.f32.gmra.mrb[0].mxu0 %v1316
  %v1384 = vpop.f32.mrb[0].mxu0
  %v1385 = vadd.f32 %v1289, %v1384
  %v1386 = vpop.f32.mrb[0].mxu0
  %1387 = vdwg.mxu0
  %v1388 = vadd.f32 %v1385, %v213
  %v1389 = vtanh.pop %v1388
  %v1390 = vmul.f32 %v1389, 0.5
  %v1391 = vadd.f32 %v1390, 0.5
  %v1392 = vsel %vm219, %v1389, %v1391
  %v1393 = vmul.f32 %v1392, %v1204
  %1395 = vrot.lane.b32.xlu0 %v1392, 64
  %v1396 = vpop.permute.xlu0 %1395
  %v1398 = vmul.f32 %v1392, %v1396
  %1400 = vrot.lane.b32.xlu0 %v1398, 32
  %v1401 = vpop.permute.xlu0 %1400
  %v1403 = vadd.f32 %v1393, %v1401
  %v1404 = vtanh.pop %v1403
  %1406 = vrot.lane.b32.xlu0 %v1404, 64
  %v1407 = vpop.permute.xlu0 %1406
  %v1409 = vmul.f32 %v1392, %v1407
  %1412 = vrot.lane.b32.xlu0 %v1409, 64
  %v1413 = vpop.permute.xlu0 %1412
  %v1415 = vsel %vm320, %v1315, %v1413
  %v1417 = vsel %vm220, %v1415, 0
  %1419 = vmatprep.subr.mxu0 %v189
  %1420 = vmatpush1.msra.mxu0 %v188
  %1421 = vmatprep.subr.mxu0 %v191
  %1422 = vmatpush1.msra.mxu0 %v190
  %1423 = vmatprep.subr.mxu0 %v193
  %1424 = vmatpush1.msra.mxu0 %v192
  %1425 = vmatprep.subr.mxu0 %v195
  %1426 = vmatpush1.msra.mxu0 %v194
  %1427 = vmatprep.subr.mxu0 %v197
  %1428 = vmatpush1.msra.mxu0 %v196
  %1429 = vmatprep.subr.mxu0 %v199
  %1430 = vmatpush1.msra.mxu0 %v198
  %1431 = vmatprep.subr.mxu0 %v201
  %1432 = vmatpush1.msra.mxu0 %v200
  %1433 = vmatprep.subr.mxu0 %v203
  %1434 = vmatpush1.msra.mxu0 %v202
  %1435 = vmatprep.subr.mxu0 0.0
  %1436 = vmatpush1.msra.mxu0 0.0
  %1437 = vmatprep.subr.mxu0 0.0
  %1438 = vmatpush1.msra.mxu0 0.0
  %1439 = vmatprep.subr.mxu0 0.0
  %1440 = vmatpush1.msra.mxu0 0.0
  %1441 = vmatprep.subr.mxu0 0.0
  %1442 = vmatpush1.msra.mxu0 0.0
  %1443 = vmatprep.subr.mxu0 0.0
  %1444 = vmatpush1.msra.mxu0 0.0
  %1445 = vmatprep.subr.mxu0 0.0
  %1446 = vmatpush1.msra.mxu0 0.0
  %1447 = vmatprep.subr.mxu0 0.0
  %1448 = vmatpush1.msra.mxu0 0.0
  %1449 = vmatprep.subr.mxu0 0.0
  %1450 = vmatpush1.msra.mxu0 0.0
  %1451 = vmatprep.subr.mxu0 0.0
  %1452 = vmatpush1.msra.mxu0 0.0
  %1453 = vmatprep.subr.mxu0 0.0
  %1454 = vmatpush1.msra.mxu0 0.0
  %1455 = vmatprep.subr.mxu0 0.0
  %1456 = vmatpush1.msra.mxu0 0.0
  %1457 = vmatprep.subr.mxu0 0.0
  %1458 = vmatpush1.msra.mxu0 0.0
  %1459 = vmatprep.subr.mxu0 0.0
  %1460 = vmatpush1.msra.mxu0 0.0
  %1461 = vmatprep.subr.mxu0 0.0
  %1462 = vmatpush1.msra.mxu0 0.0
  %1463 = vmatprep.subr.mxu0 0.0
  %1464 = vmatpush1.msra.mxu0 0.0
  %1465 = vmatprep.subr.mxu0 0.0
  %1466 = vmatpush1.msra.mxu0 0.0
  %1467 = vmatprep.subr.mxu0 0.0
  %1468 = vmatpush1.msra.mxu0 0.0
  %1469 = vmatprep.subr.mxu0 0.0
  %1470 = vmatpush1.msra.mxu0 0.0
  %1471 = vmatprep.subr.mxu0 0.0
  %1472 = vmatpush1.msra.mxu0 0.0
  %1473 = vmatprep.subr.mxu0 0.0
  %1474 = vmatpush1.msra.mxu0 0.0
  %1475 = vmatprep.subr.mxu0 0.0
  %1476 = vmatpush1.msra.mxu0 0.0
  %1477 = vmatprep.subr.mxu0 0.0
  %1478 = vmatpush1.msra.mxu0 0.0
  %1479 = vmatprep.subr.mxu0 0.0
  %1480 = vmatpush1.msra.mxu0 0.0
  %1481 = vmatprep.subr.mxu0 0.0
  %1482 = vmatpush1.msra.mxu0 0.0
  %1483 = vmatprep.mubr.f32.mxu0 0.0
  %1484 = vmatmul.mubr.f32.gmra.mrb[0].mxu0 %v1417
  %v1485 = vpop.f32.mrb[0].mxu0
  %v1486 = vadd.f32 0.0, %v1485
  %v1487 = vpop.f32.mrb[0].mxu0
  %v1488 = vadd.f32 0.0, %v1487
  %1489 = vdwg.mxu0
  %v1490 = vadd.f32 %v180, %v1486
  %v1491 = vtanh.pop %v1490
  %v1492 = vmul.f32 %v1491, 0.5
  %v1493 = vadd.f32 %v1492, 0.5
  %v1494 = vsel %vm219, %v1491, %v1493
  %v1495 = vmul.f32 %v1494, %v1306
  %1497 = vrot.lane.b32.xlu0 %v1494, 64
  %v1498 = vpop.permute.xlu0 %1497
  %v1500 = vmul.f32 %v1494, %v1498
  %1502 = vrot.lane.b32.xlu0 %v1500, 32
  %v1503 = vpop.permute.xlu0 %1502
  %v1505 = vadd.f32 %v1495, %v1503
  %v1506 = vtanh.pop %v1505
  %1508 = vrot.lane.b32.xlu0 %v1506, 64
  %v1509 = vpop.permute.xlu0 %1508
  %v1511 = vmul.f32 %v1494, %v1509
  %1513 = vrot.lane.b32.xlu0 %v1511, 32
  %v1514 = vpop.permute.xlu0 %1513
  %v1515 = vsel %vm320, %v1514, 0
  %1517 = vmatprep.subr.mxu0 0.0
  %1518 = vmatpush1.msra.mxu0 %v204
  %1519 = vmatprep.subr.mxu0 0.0
  %1520 = vmatpush1.msra.mxu0 %v205
  %1521 = vmatprep.subr.mxu0 0.0
  %1522 = vmatpush1.msra.mxu0 %v206
  %1523 = vmatprep.subr.mxu0 0.0
  %1524 = vmatpush1.msra.mxu0 %v207
  %1525 = vmatprep.subr.mxu0 0.0
  %1526 = vmatpush1.msra.mxu0 0.0
  %1527 = vmatprep.subr.mxu0 0.0
  %1528 = vmatpush1.msra.mxu0 0.0
  %1529 = vmatprep.subr.mxu0 0.0
  %1530 = vmatpush1.msra.mxu0 0.0
  %1531 = vmatprep.subr.mxu0 0.0
  %1532 = vmatpush1.msra.mxu0 0.0
  %1533 = vmatprep.subr.mxu0 0.0
  %1534 = vmatpush1.msra.mxu0 0.0
  %1535 = vmatprep.subr.mxu0 0.0
  %1536 = vmatpush1.msra.mxu0 0.0
  %1537 = vmatprep.subr.mxu0 0.0
  %1538 = vmatpush1.msra.mxu0 0.0
  %1539 = vmatprep.subr.mxu0 0.0
  %1540 = vmatpush1.msra.mxu0 0.0
  %1541 = vmatprep.subr.mxu0 0.0
  %1542 = vmatpush1.msra.mxu0 0.0
  %1543 = vmatprep.subr.mxu0 0.0
  %1544 = vmatpush1.msra.mxu0 0.0
  %1545 = vmatprep.subr.mxu0 0.0
  %1546 = vmatpush1.msra.mxu0 0.0
  %1547 = vmatprep.subr.mxu0 0.0
  %1548 = vmatpush1.msra.mxu0 0.0
  %1549 = vmatprep.subr.mxu0 0.0
  %1550 = vmatpush1.msra.mxu0 0.0
  %1551 = vmatprep.subr.mxu0 0.0
  %1552 = vmatpush1.msra.mxu0 0.0
  %1553 = vmatprep.subr.mxu0 0.0
  %1554 = vmatpush1.msra.mxu0 0.0
  %1555 = vmatprep.subr.mxu0 0.0
  %1556 = vmatpush1.msra.mxu0 0.0
  %1557 = vmatprep.subr.mxu0 0.0
  %1558 = vmatpush1.msra.mxu0 0.0
  %1559 = vmatprep.subr.mxu0 0.0
  %1560 = vmatpush1.msra.mxu0 0.0
  %1561 = vmatprep.subr.mxu0 0.0
  %1562 = vmatpush1.msra.mxu0 0.0
  %1563 = vmatprep.subr.mxu0 0.0
  %1564 = vmatpush1.msra.mxu0 0.0
  %1565 = vmatprep.subr.mxu0 0.0
  %1566 = vmatpush1.msra.mxu0 0.0
  %1567 = vmatprep.subr.mxu0 0.0
  %1568 = vmatpush1.msra.mxu0 0.0
  %1569 = vmatprep.subr.mxu0 0.0
  %1570 = vmatpush1.msra.mxu0 0.0
  %1571 = vmatprep.subr.mxu0 0.0
  %1572 = vmatpush1.msra.mxu0 0.0
  %1573 = vmatprep.subr.mxu0 0.0
  %1574 = vmatpush1.msra.mxu0 0.0
  %1575 = vmatprep.subr.mxu0 0.0
  %1576 = vmatpush1.msra.mxu0 0.0
  %1577 = vmatprep.subr.mxu0 0.0
  %1578 = vmatpush1.msra.mxu0 0.0
  %1579 = vmatprep.subr.mxu0 0.0
  %1580 = vmatpush1.msra.mxu0 0.0
  %1581 = vmatprep.mubr.f32.mxu0 0.0
  %1582 = vmatmul.mubr.f32.gmra.mrb[0].mxu0 %v1515
  %v1583 = vpop.f32.mrb[0].mxu0
  %v1584 = vadd.f32 %v1488, %v1583
  %v1585 = vpop.f32.mrb[0].mxu0
  %1586 = vdwg.mxu0
  %v1587 = vadd.f32 %v1584, %v213
  %v1588 = vtanh.pop %v1587
  %v1589 = vmul.f32 %v1588, 0.5
  %v1590 = vadd.f32 %v1589, 0.5
  %v1591 = vsel %vm219, %v1588, %v1590
  %v1592 = vmul.f32 %v1591, %v1403
  %1594 = vrot.lane.b32.xlu0 %v1591, 64
  %v1595 = vpop.permute.xlu0 %1594
  %v1597 = vmul.f32 %v1591, %v1595
  %1599 = vrot.lane.b32.xlu0 %v1597, 32
  %v1600 = vpop.permute.xlu0 %1599
  %v1602 = vadd.f32 %v1592, %v1600
  %v1603 = vtanh.pop %v1602
  %1605 = vrot.lane.b32.xlu0 %v1603, 64
  %v1606 = vpop.permute.xlu0 %1605
  %v1608 = vmul.f32 %v1591, %v1606
  %1611 = vrot.lane.b32.xlu0 %v1608, 64
  %v1612 = vpop.permute.xlu0 %1611
  %v1614 = vsel %vm320, %v1514, %v1612
  %v1616 = vsel %vm220, %v1614, 0
  %1618 = vmatprep.subr.mxu0 %v189
  %1619 = vmatpush1.msra.mxu0 %v188
  %1620 = vmatprep.subr.mxu0 %v191
  %1621 = vmatpush1.msra.mxu0 %v190
  %1622 = vmatprep.subr.mxu0 %v193
  %1623 = vmatpush1.msra.mxu0 %v192
  %1624 = vmatprep.subr.mxu0 %v195
  %1625 = vmatpush1.msra.mxu0 %v194
  %1626 = vmatprep.subr.mxu0 %v197
  %1627 = vmatpush1.msra.mxu0 %v196
  %1628 = vmatprep.subr.mxu0 %v199
  %1629 = vmatpush1.msra.mxu0 %v198
  %1630 = vmatprep.subr.mxu0 %v201
  %1631 = vmatpush1.msra.mxu0 %v200
  %1632 = vmatprep.subr.mxu0 %v203
  %1633 = vmatpush1.msra.mxu0 %v202
  %1634 = vmatprep.subr.mxu0 0.0
  %1635 = vmatpush1.msra.mxu0 0.0
  %1636 = vmatprep.subr.mxu0 0.0
  %1637 = vmatpush1.msra.mxu0 0.0
  %1638 = vmatprep.subr.mxu0 0.0
  %1639 = vmatpush1.msra.mxu0 0.0
  %1640 = vmatprep.subr.mxu0 0.0
  %1641 = vmatpush1.msra.mxu0 0.0
  %1642 = vmatprep.subr.mxu0 0.0
  %1643 = vmatpush1.msra.mxu0 0.0
  %1644 = vmatprep.subr.mxu0 0.0
  %1645 = vmatpush1.msra.mxu0 0.0
  %1646 = vmatprep.subr.mxu0 0.0
  %1647 = vmatpush1.msra.mxu0 0.0
  %1648 = vmatprep.subr.mxu0 0.0
  %1649 = vmatpush1.msra.mxu0 0.0
  %1650 = vmatprep.subr.mxu0 0.0
  %1651 = vmatpush1.msra.mxu0 0.0
  %1652 = vmatprep.subr.mxu0 0.0
  %1653 = vmatpush1.msra.mxu0 0.0
  %1654 = vmatprep.subr.mxu0 0.0
  %1655 = vmatpush1.msra.mxu0 0.0
  %1656 = vmatprep.subr.mxu0 0.0
  %1657 = vmatpush1.msra.mxu0 0.0
  %1658 = vmatprep.subr.mxu0 0.0
  %1659 = vmatpush1.msra.mxu0 0.0
  %1660 = vmatprep.subr.mxu0 0.0
  %1661 = vmatpush1.msra.mxu0 0.0
  %1662 = vmatprep.subr.mxu0 0.0
  %1663 = vmatpush1.msra.mxu0 0.0
  %1664 = vmatprep.subr.mxu0 0.0
  %1665 = vmatpush1.msra.mxu0 0.0
  %1666 = vmatprep.subr.mxu0 0.0
  %1667 = vmatpush1.msra.mxu0 0.0
  %1668 = vmatprep.subr.mxu0 0.0
  %1669 = vmatpush1.msra.mxu0 0.0
  %1670 = vmatprep.subr.mxu0 0.0
  %1671 = vmatpush1.msra.mxu0 0.0
  %1672 = vmatprep.subr.mxu0 0.0
  %1673 = vmatpush1.msra.mxu0 0.0
  %1674 = vmatprep.subr.mxu0 0.0
  %1675 = vmatpush1.msra.mxu0 0.0
  %1676 = vmatprep.subr.mxu0 0.0
  %1677 = vmatpush1.msra.mxu0 0.0
  %1678 = vmatprep.subr.mxu0 0.0
  %1679 = vmatpush1.msra.mxu0 0.0
  %1680 = vmatprep.subr.mxu0 0.0
  %1681 = vmatpush1.msra.mxu0 0.0
  %1682 = vmatprep.mubr.f32.mxu0 0.0
  %1683 = vmatmul.mubr.f32.gmra.mrb[0].mxu0 %v1616
  %v1684 = vpop.f32.mrb[0].mxu0
  %v1685 = vadd.f32 0.0, %v1684
  %v1686 = vpop.f32.mrb[0].mxu0
  %v1687 = vadd.f32 0.0, %v1686
  %1688 = vdwg.mxu0
  %v1689 = vadd.f32 %v185, %v1685
  %v1690 = vtanh.pop %v1689
  %v1691 = vmul.f32 %v1690, 0.5
  %v1692 = vadd.f32 %v1691, 0.5
  %v1693 = vsel %vm219, %v1690, %v1692
  %v1694 = vmul.f32 %v1693, %v1505
  %1696 = vrot.lane.b32.xlu0 %v1693, 64
  %v1697 = vpop.permute.xlu0 %1696
  %v1699 = vmul.f32 %v1693, %v1697
  %1701 = vrot.lane.b32.xlu0 %v1699, 32
  %v1702 = vpop.permute.xlu0 %1701
  %v1704 = vadd.f32 %v1694, %v1702
  %v1705 = vtanh.pop %v1704
  %1707 = vrot.lane.b32.xlu0 %v1705, 64
  %v1708 = vpop.permute.xlu0 %1707
  %v1710 = vmul.f32 %v1693, %v1708
  %1712 = vrot.lane.b32.xlu0 %v1710, 32
  %v1713 = vpop.permute.xlu0 %1712
  %v1714 = vsel %vm320, %v1713, 0
  %1716 = vmatprep.subr.mxu0 0.0
  %1717 = vmatpush1.msra.mxu0 %v204
  %1718 = vmatprep.subr.mxu0 0.0
  %1719 = vmatpush1.msra.mxu0 %v205
  %1720 = vmatprep.subr.mxu0 0.0
  %1721 = vmatpush1.msra.mxu0 %v206
  %1722 = vmatprep.subr.mxu0 0.0
  %1723 = vmatpush1.msra.mxu0 %v207
  %1724 = vmatprep.subr.mxu0 0.0
  %1725 = vmatpush1.msra.mxu0 0.0
  %1726 = vmatprep.subr.mxu0 0.0
  %1727 = vmatpush1.msra.mxu0 0.0
  %1728 = vmatprep.subr.mxu0 0.0
  %1729 = vmatpush1.msra.mxu0 0.0
  %1730 = vmatprep.subr.mxu0 0.0
  %1731 = vmatpush1.msra.mxu0 0.0
  %1732 = vmatprep.subr.mxu0 0.0
  %1733 = vmatpush1.msra.mxu0 0.0
  %1734 = vmatprep.subr.mxu0 0.0
  %1735 = vmatpush1.msra.mxu0 0.0
  %1736 = vmatprep.subr.mxu0 0.0
  %1737 = vmatpush1.msra.mxu0 0.0
  %1738 = vmatprep.subr.mxu0 0.0
  %1739 = vmatpush1.msra.mxu0 0.0
  %1740 = vmatprep.subr.mxu0 0.0
  %1741 = vmatpush1.msra.mxu0 0.0
  %1742 = vmatprep.subr.mxu0 0.0
  %1743 = vmatpush1.msra.mxu0 0.0
  %1744 = vmatprep.subr.mxu0 0.0
  %1745 = vmatpush1.msra.mxu0 0.0
  %1746 = vmatprep.subr.mxu0 0.0
  %1747 = vmatpush1.msra.mxu0 0.0
  %1748 = vmatprep.subr.mxu0 0.0
  %1749 = vmatpush1.msra.mxu0 0.0
  %1750 = vmatprep.subr.mxu0 0.0
  %1751 = vmatpush1.msra.mxu0 0.0
  %1752 = vmatprep.subr.mxu0 0.0
  %1753 = vmatpush1.msra.mxu0 0.0
  %1754 = vmatprep.subr.mxu0 0.0
  %1755 = vmatpush1.msra.mxu0 0.0
  %1756 = vmatprep.subr.mxu0 0.0
  %1757 = vmatpush1.msra.mxu0 0.0
  %1758 = vmatprep.subr.mxu0 0.0
  %1759 = vmatpush1.msra.mxu0 0.0
  %1760 = vmatprep.subr.mxu0 0.0
  %1761 = vmatpush1.msra.mxu0 0.0
  %1762 = vmatprep.subr.mxu0 0.0
  %1763 = vmatpush1.msra.mxu0 0.0
  %1764 = vmatprep.subr.mxu0 0.0
  %1765 = vmatpush1.msra.mxu0 0.0
  %1766 = vmatprep.subr.mxu0 0.0
  %1767 = vmatpush1.msra.mxu0 0.0
  %1768 = vmatprep.subr.mxu0 0.0
  %1769 = vmatpush1.msra.mxu0 0.0
  %1770 = vmatprep.subr.mxu0 0.0
  %1771 = vmatpush1.msra.mxu0 0.0
  %1772 = vmatprep.subr.mxu0 0.0
  %1773 = vmatpush1.msra.mxu0 0.0
  %1774 = vmatprep.subr.mxu0 0.0
  %1775 = vmatpush1.msra.mxu0 0.0
  %1776 = vmatprep.subr.mxu0 0.0
  %1777 = vmatpush1.msra.mxu0 0.0
  %1778 = vmatprep.subr.mxu0 0.0
  %1779 = vmatpush1.msra.mxu0 0.0
  %1780 = vmatprep.mubr.f32.mxu0 0.0
  %1781 = vmatmul.mubr.f32.gmra.mrb[0].mxu0 %v1714
  %v1782 = vpop.f32.mrb[0].mxu0
  %v1783 = vadd.f32 %v1687, %v1782
  %v1784 = vpop.f32.mrb[0].mxu0
  %1785 = vdwg.mxu0
  %v1786 = vadd.f32 %v1783, %v213
  %v1787 = vtanh.pop %v1786
  %v1788 = vmul.f32 %v1787, 0.5
  %v1789 = vadd.f32 %v1788, 0.5
  %v1790 = vsel %vm219, %v1787, %v1789
  %v1791 = vmul.f32 %v1790, %v1602
  %1793 = vrot.lane.b32.xlu0 %v1790, 64
  %v1794 = vpop.permute.xlu0 %1793
  %v1796 = vmul.f32 %v1790, %v1794
  %1798 = vrot.lane.b32.xlu0 %v1796, 32
  %v1799 = vpop.permute.xlu0 %1798
  %v1801 = vadd.f32 %v1791, %v1799
  %v1802 = vtanh.pop %v1801
  %1804 = vrot.lane.b32.xlu0 %v1802, 64
  %v1805 = vpop.permute.xlu0 %1804
  %v1807 = vmul.f32 %v1790, %v1805
  %v1808 = vld [vmem:[%s6] sm:$0xff]
  %v1809 = vld [vmem:[%s6 + $0x8] sm:$0xff]
  %v1810 = vld [vmem:[%s6 + $0x10] sm:$0xff]
  %v1811 = vld [vmem:[%s6 + $0x18] sm:$0xff]
  %v1812 = vld [vmem:[%s7] sm:$0x1]
  %v1814 = vlaneseq
  %v1815 = vshrl.u32 %v1814, 7
  %v1816 = vsub.s32 0, %v1815
  %v1817 = vrot.slane %v1812, %v1816
  %1820 = vrot.lane.b32.xlu0 %v1807, 32
  %v1821 = vpop.permute.xlu0 %1820
  %v1822 = vsel %vm320, %v1821, 0
  %1824 = vmatprep.subr.mxu0 0.0
  %1825 = vmatpush1.msra.mxu0 %v1808
  %1826 = vmatprep.subr.mxu0 0.0
  %1827 = vmatpush1.msra.mxu0 %v1809
  %1828 = vmatprep.subr.mxu0 0.0
  %1829 = vmatpush1.msra.mxu0 %v1810
  %1830 = vmatprep.subr.mxu0 0.0
  %1831 = vmatpush1.msra.mxu0 %v1811
  %1832 = vmatprep.subr.mxu0 0.0
  %1833 = vmatpush1.msra.mxu0 0.0
  %1834 = vmatprep.subr.mxu0 0.0
  %1835 = vmatpush1.msra.mxu0 0.0
  %1836 = vmatprep.subr.mxu0 0.0
  %1837 = vmatpush1.msra.mxu0 0.0
  %1838 = vmatprep.subr.mxu0 0.0
  %1839 = vmatpush1.msra.mxu0 0.0
  %1840 = vmatprep.subr.mxu0 0.0
  %1841 = vmatpush1.msra.mxu0 0.0
  %1842 = vmatprep.subr.mxu0 0.0
  %1843 = vmatpush1.msra.mxu0 0.0
  %1844 = vmatprep.subr.mxu0 0.0
  %1845 = vmatpush1.msra.mxu0 0.0
  %1846 = vmatprep.subr.mxu0 0.0
  %1847 = vmatpush1.msra.mxu0 0.0
  %1848 = vmatprep.subr.mxu0 0.0
  %1849 = vmatpush1.msra.mxu0 0.0
  %1850 = vmatprep.subr.mxu0 0.0
  %1851 = vmatpush1.msra.mxu0 0.0
  %1852 = vmatprep.subr.mxu0 0.0
  %1853 = vmatpush1.msra.mxu0 0.0
  %1854 = vmatprep.subr.mxu0 0.0
  %1855 = vmatpush1.msra.mxu0 0.0
  %1856 = vmatprep.subr.mxu0 0.0
  %1857 = vmatpush1.msra.mxu0 0.0
  %1858 = vmatprep.subr.mxu0 0.0
  %1859 = vmatpush1.msra.mxu0 0.0
  %1860 = vmatprep.subr.mxu0 0.0
  %1861 = vmatpush1.msra.mxu0 0.0
  %1862 = vmatprep.subr.mxu0 0.0
  %1863 = vmatpush1.msra.mxu0 0.0
  %1864 = vmatprep.subr.mxu0 0.0
  %1865 = vmatpush1.msra.mxu0 0.0
  %1866 = vmatprep.subr.mxu0 0.0
  %1867 = vmatpush1.msra.mxu0 0.0
  %1868 = vmatprep.subr.mxu0 0.0
  %1869 = vmatpush1.msra.mxu0 0.0
  %1870 = vmatprep.subr.mxu0 0.0
  %1871 = vmatpush1.msra.mxu0 0.0
  %1872 = vmatprep.subr.mxu0 0.0
  %1873 = vmatpush1.msra.mxu0 0.0
  %1874 = vmatprep.subr.mxu0 0.0
  %1875 = vmatpush1.msra.mxu0 0.0
  %1876 = vmatprep.subr.mxu0 0.0
  %1877 = vmatpush1.msra.mxu0 0.0
  %1878 = vmatprep.subr.mxu0 0.0
  %1879 = vmatpush1.msra.mxu0 0.0
  %1880 = vmatprep.subr.mxu0 0.0
  %1881 = vmatpush1.msra.mxu0 0.0
  %1882 = vmatprep.subr.mxu0 0.0
  %1883 = vmatpush1.msra.mxu0 0.0
  %1884 = vmatprep.subr.mxu0 0.0
  %1885 = vmatpush1.msra.mxu0 0.0
  %1886 = vmatprep.subr.mxu0 0.0
  %1887 = vmatpush1.msra.mxu0 0.0
  %1888 = vmatprep.mubr.f32.mxu0 0.0
  %1889 = vmatmul.mubr.f32.gmra.mrb[0].mxu0 %v1822
  %v1890 = vpop.f32.mrb[0].mxu0
  %v1891 = vadd.f32 %v1817, %v1890
  %v1892 = vpop.f32.mrb[0].mxu0
  %1893 = vdwg.mxu0
  %v1894 = vmax.f32 %v1891, 0.0
  %v1895 = vld [vmem:[%s8] sm:$0xff]
  %v1896 = vld [vmem:[%s8 + $0x8] sm:$0xff]
  %v1897 = vld [vmem:[%s8 + $0x10] sm:$0xff]
  %v1898 = vld [vmem:[%s8 + $0x18] sm:$0xff]
  %v1899 = vld [vmem:[%s8 + $0x20] sm:$0xff]
  %v1900 = vld [vmem:[%s8 + $0x28] sm:$0xff]
  %v1901 = vld [vmem:[%s8 + $0x30] sm:$0xff]
  %v1902 = vld [vmem:[%s8 + $0x38] sm:$0xff]
  %v1903 = vld [vmem:[%s8 + $0x40] sm:$0xff]
  %v1904 = vld [vmem:[%s8 + $0x48] sm:$0xff]
  %v1905 = vld [vmem:[%s8 + $0x50] sm:$0xff]
  %v1906 = vld [vmem:[%s8 + $0x58] sm:$0xff]
  %v1907 = vld [vmem:[%s8 + $0x60] sm:$0xff]
  %v1908 = vld [vmem:[%s8 + $0x68] sm:$0xff]
  %v1909 = vld [vmem:[%s8 + $0x70] sm:$0xff]
  %v1910 = vld [vmem:[%s8 + $0x78] sm:$0xff]
  %v1911 = vld [vmem:[%s9] sm:$0x1]
  %v1913 = vlaneseq
  %v1914 = vshrl.u32 %v1913, 7
  %v1915 = vsub.s32 0, %v1914
  %v1916 = vrot.slane %v1911, %v1915
  %1918 = vmatprep.subr.mxu0 0.0
  %1919 = vmatpush1.msra.mxu0 %v1895
  %1920 = vmatprep.subr.mxu0 0.0
  %1921 = vmatpush1.msra.mxu0 %v1896
  %1922 = vmatprep.subr.mxu0 0.0
  %1923 = vmatpush1.msra.mxu0 %v1897
  %1924 = vmatprep.subr.mxu0 0.0
  %1925 = vmatpush1.msra.mxu0 %v1898
  %1926 = vmatprep.subr.mxu0 0.0
  %1927 = vmatpush1.msra.mxu0 %v1899
  %1928 = vmatprep.subr.mxu0 0.0
  %1929 = vmatpush1.msra.mxu0 %v1900
  %1930 = vmatprep.subr.mxu0 0.0
  %1931 = vmatpush1.msra.mxu0 %v1901
  %1932 = vmatprep.subr.mxu0 0.0
  %1933 = vmatpush1.msra.mxu0 %v1902
  %1934 = vmatprep.subr.mxu0 0.0
  %1935 = vmatpush1.msra.mxu0 %v1903
  %1936 = vmatprep.subr.mxu0 0.0
  %1937 = vmatpush1.msra.mxu0 %v1904
  %1938 = vmatprep.subr.mxu0 0.0
  %1939 = vmatpush1.msra.mxu0 %v1905
  %1940 = vmatprep.subr.mxu0 0.0
  %1941 = vmatpush1.msra.mxu0 %v1906
  %1942 = vmatprep.subr.mxu0 0.0
  %1943 = vmatpush1.msra.mxu0 %v1907
  %1944 = vmatprep.subr.mxu0 0.0
  %1945 = vmatpush1.msra.mxu0 %v1908
  %1946 = vmatprep.subr.mxu0 0.0
  %1947 = vmatpush1.msra.mxu0 %v1909
  %1948 = vmatprep.subr.mxu0 0.0
  %1949 = vmatpush1.msra.mxu0 %v1910
  %1950 = vmatprep.subr.mxu0 0.0
  %1951 = vmatpush1.msra.mxu0 0.0
  %1952 = vmatprep.subr.mxu0 0.0
  %1953 = vmatpush1.msra.mxu0 0.0
  %1954 = vmatprep.subr.mxu0 0.0
  %1955 = vmatpush1.msra.mxu0 0.0
  %1956 = vmatprep.subr.mxu0 0.0
  %1957 = vmatpush1.msra.mxu0 0.0
  %1958 = vmatprep.subr.mxu0 0.0
  %1959 = vmatpush1.msra.mxu0 0.0
  %1960 = vmatprep.subr.mxu0 0.0
  %1961 = vmatpush1.msra.mxu0 0.0
  %1962 = vmatprep.subr.mxu0 0.0
  %1963 = vmatpush1.msra.mxu0 0.0
  %1964 = vmatprep.subr.mxu0 0.0
  %1965 = vmatpush1.msra.mxu0 0.0
  %1966 = vmatprep.subr.mxu0 0.0
  %1967 = vmatpush1.msra.mxu0 0.0
  %1968 = vmatprep.subr.mxu0 0.0
  %1969 = vmatpush1.msra.mxu0 0.0
  %1970 = vmatprep.subr.mxu0 0.0
  %1971 = vmatpush1.msra.mxu0 0.0
  %1972 = vmatprep.subr.mxu0 0.0
  %1973 = vmatpush1.msra.mxu0 0.0
  %1974 = vmatprep.subr.mxu0 0.0
  %1975 = vmatpush1.msra.mxu0 0.0
  %1976 = vmatprep.subr.mxu0 0.0
  %1977 = vmatpush1.msra.mxu0 0.0
  %1978 = vmatprep.subr.mxu0 0.0
  %1979 = vmatpush1.msra.mxu0 0.0
  %1980 = vmatprep.subr.mxu0 0.0
  %1981 = vmatpush1.msra.mxu0 0.0
  %1982 = vmatprep.mubr.f32.mxu0 0.0
  %1983 = vmatmul.mubr.f32.gmra.mrb[0].mxu0 %v1894
  %v1984 = vpop.f32.mrb[0].mxu0
  %v1985 = vadd.f32 %v1916, %v1984
  %v1986 = vpop.f32.mrb[0].mxu0
  %1987 = vdwg.mxu0
  %v1988 = vmax.f32 %v1985, 0.0
  %v1989 = vld [vmem:[%s10] sm:$0xff]
  %v1990 = vld [vmem:[%s10 + $0x8] sm:$0xff]
  %v1991 = vld [vmem:[%s10 + $0x10] sm:$0xff]
  %v1992 = vld [vmem:[%s10 + $0x18] sm:$0xff]
  %v1993 = vld [vmem:[%s10 + $0x20] sm:$0xff]
  %v1994 = vld [vmem:[%s10 + $0x28] sm:$0xff]
  %v1995 = vld [vmem:[%s10 + $0x30] sm:$0xff]
  %v1996 = vld [vmem:[%s10 + $0x38] sm:$0xff]
  %v1997 = vld [vmem:[%s10 + $0x40] sm:$0xff]
  %v1998 = vld [vmem:[%s10 + $0x48] sm:$0xff]
  %v1999 = vld [vmem:[%s10 + $0x50] sm:$0xff]
  %v2000 = vld [vmem:[%s10 + $0x58] sm:$0xff]
  %v2001 = vld [vmem:[%s10 + $0x60] sm:$0xff]
  %v2002 = vld [vmem:[%s10 + $0x68] sm:$0xff]
  %v2003 = vld [vmem:[%s10 + $0x70] sm:$0xff]
  %v2004 = vld [vmem:[%s10 + $0x78] sm:$0xff]
  %v2005 = vld [vmem:[%s11] sm:$0x1]
  %v2007 = vlaneseq
  %v2008 = vshrl.u32 %v2007, 7
  %v2009 = vsub.s32 0, %v2008
  %v2010 = vrot.slane %v2005, %v2009
  %2012 = vmatprep.subr.mxu0 0.0
  %2013 = vmatpush1.msra.mxu0 %v1989
  %2014 = vmatprep.subr.mxu0 0.0
  %2015 = vmatpush1.msra.mxu0 %v1990
  %2016 = vmatprep.subr.mxu0 0.0
  %2017 = vmatpush1.msra.mxu0 %v1991
  %2018 = vmatprep.subr.mxu0 0.0
  %2019 = vmatpush1.msra.mxu0 %v1992
  %2020 = vmatprep.subr.mxu0 0.0
  %2021 = vmatpush1.msra.mxu0 %v1993
  %2022 = vmatprep.subr.mxu0 0.0
  %2023 = vmatpush1.msra.mxu0 %v1994
  %2024 = vmatprep.subr.mxu0 0.0
  %2025 = vmatpush1.msra.mxu0 %v1995
  %2026 = vmatprep.subr.mxu0 0.0
  %2027 = vmatpush1.msra.mxu0 %v1996
  %2028 = vmatprep.subr.mxu0 0.0
  %2029 = vmatpush1.msra.mxu0 %v1997
  %2030 = vmatprep.subr.mxu0 0.0
  %2031 = vmatpush1.msra.mxu0 %v1998
  %2032 = vmatprep.subr.mxu0 0.0
  %2033 = vmatpush1.msra.mxu0 %v1999
  %2034 = vmatprep.subr.mxu0 0.0
  %2035 = vmatpush1.msra.mxu0 %v2000
  %2036 = vmatprep.subr.mxu0 0.0
  %2037 = vmatpush1.msra.mxu0 %v2001
  %2038 = vmatprep.subr.mxu0 0.0
  %2039 = vmatpush1.msra.mxu0 %v2002
  %2040 = vmatprep.subr.mxu0 0.0
  %2041 = vmatpush1.msra.mxu0 %v2003
  %2042 = vmatprep.subr.mxu0 0.0
  %2043 = vmatpush1.msra.mxu0 %v2004
  %2044 = vmatprep.subr.mxu0 0.0
  %2045 = vmatpush1.msra.mxu0 0.0
  %2046 = vmatprep.subr.mxu0 0.0
  %2047 = vmatpush1.msra.mxu0 0.0
  %2048 = vmatprep.subr.mxu0 0.0
  %2049 = vmatpush1.msra.mxu0 0.0
  %2050 = vmatprep.subr.mxu0 0.0
  %2051 = vmatpush1.msra.mxu0 0.0
  %2052 = vmatprep.subr.mxu0 0.0
  %2053 = vmatpush1.msra.mxu0 0.0
  %2054 = vmatprep.subr.mxu0 0.0
  %2055 = vmatpush1.msra.mxu0 0.0
  %2056 = vmatprep.subr.mxu0 0.0
  %2057 = vmatpush1.msra.mxu0 0.0
  %2058 = vmatprep.subr.mxu0 0.0
  %2059 = vmatpush1.msra.mxu0 0.0
  %2060 = vmatprep.subr.mxu0 0.0
  %2061 = vmatpush1.msra.mxu0 0.0
  %2062 = vmatprep.subr.mxu0 0.0
  %2063 = vmatpush1.msra.mxu0 0.0
  %2064 = vmatprep.subr.mxu0 0.0
  %2065 = vmatpush1.msra.mxu0 0.0
  %2066 = vmatprep.subr.mxu0 0.0
  %2067 = vmatpush1.msra.mxu0 0.0
  %2068 = vmatprep.subr.mxu0 0.0
  %2069 = vmatpush1.msra.mxu0 0.0
  %2070 = vmatprep.subr.mxu0 0.0
  %2071 = vmatpush1.msra.mxu0 0.0
  %2072 = vmatprep.subr.mxu0 0.0
  %2073 = vmatpush1.msra.mxu0 0.0
  %2074 = vmatprep.subr.mxu0 0.0
  %2075 = vmatpush1.msra.mxu0 0.0
  %2076 = vmatprep.mubr.f32.mxu0 0.0
  %2077 = vmatmul.mubr.f32.gmra.mrb[0].mxu0 %v1988
  %v2078 = vpop.f32.mrb[0].mxu0
  %v2079 = vadd.f32 %v2010, %v2078
  %v2080 = vpop.f32.mrb[0].mxu0
  %2081 = vdwg.mxu0
  %2082 = vst [vmem:[%s12] sm:$0xff] %v2079
  // Predicated region
  $region50: #{rnn_model_forward.1} parent=0 // pred_check
    _
  $region51: #{rnn_model_forward.1} parent=0 // pred_check_branch
    %2084 = sbr.rel (0) target = $region53
  $region52: #{rnn_model_forward.1} parent=0 // pred_region
    _
  $region53: #{rnn_model_forward.1} parent=0 // pred_fallthru
    _
  // Predicated region
  $region54: #{rnn_model_forward.1} parent=0 // pred_check
    _
  $region55: #{rnn_model_forward.1} parent=0 // pred_check_branch
    %2086 = sbr.rel (0) target = $region57
  $region56: #{rnn_model_forward.1} parent=0 // pred_region
    _
  $region57: #{rnn_model_forward.1} parent=0 // pred_fallthru
    _

</llo_original>
